<compile_context>
chip_gen: v5e
topology: v5e:2x2
jax: 0.10.0
libtpu: 0.0.40
codegen_flags: <defaults>
</compile_context>

<pallas_src>
import numpy as np
import jax
import jax.numpy as jnp
from jax import lax
from jax.experimental import pallas as pl
from jax.experimental.pallas import tpu as pltpu

NEG_SLOPE = 0.01   # torch.nn.LeakyReLU default negative_slope
BN_EPS = 1e-5      # torch.nn.BatchNorm2d default eps


def _leaky(v):
    return jnp.where(v >= 0, v, NEG_SLOPE * v)


# ---------------------------------------------------------------------------
# Host-side weight packing
# ---------------------------------------------------------------------------
def _band_weight(w_hwio, W):
    """Fold kx taps + x zero-padding of a 3x3 HWIO conv weight into three
    block-banded matrices stacked along K: (3*W*Cin, W*Cout); band order is
    the ky tap (row y-1, y, y+1)."""
    kh, kw, cin, cout = w_hwio.shape
    assert kh == 3 and kw == 3
    wb = np.zeros((kh, W * cin, W * cout), np.float32)
    for ky in range(kh):
        for xo in range(W):
            for kx in range(kw):
                xi = xo + kx - 1
                if 0 <= xi < W:
                    wb[ky, xi * cin:(xi + 1) * cin,
                       xo * cout:(xo + 1) * cout] = w_hwio[ky, kx]
    return wb.reshape(kh * W * cin, W * cout)


# ---------------------------------------------------------------------------
# Kernel: full _RCBlock forward on a (batch_block*H, W*C) slab
# ---------------------------------------------------------------------------
def _make_rcblock_kernel(h_img):
    def kernel(x_ref,
               bn1s_ref, bn1b_ref, wb1_ref,
               bn2s_ref, bn2b_ref, wb2sk_ref, bfin_ref,
               o_ref):
        m = x_ref.shape[0]                          # batch_block * H rows
        xf = x_ref[...].astype(jnp.float32)         # (M, W*C); HBM slab is bf16

        # Image-boundary masks for the ky row shifts.  pltpu.roll wraps, so
        # the mask is required even when the slab holds a single image.
        row = lax.broadcasted_iota(jnp.int32, (m, 1), 0) % h_img
        not_top = row != 0
        not_bot = row != (h_img - 1)

        def tap_lhs(act):
            # (M, 3*width): rows y-1 | y | y+1, zeroed across image boundaries.
            up = jnp.where(not_top, pltpu.roll(act, shift=1, axis=0), 0.0)
            dn = jnp.where(not_bot, pltpu.roll(act, shift=m - 1, axis=0), 0.0)
            return jnp.concatenate([up, act, dn], axis=1)

        # BN1 -> LeakyReLU -> conv1 (all 9 taps in one K = 3*W*C matmul)
        a1 = _leaky(xf * bn1s_ref[...] + bn1b_ref[...])
        h1 = jnp.dot(tap_lhs(a1).astype(jnp.bfloat16), wb1_ref[...],
                     preferred_element_type=jnp.float32)

        # BN2 (conv1 bias pre-folded into the shift) -> LeakyReLU
        a2 = _leaky(h1 * bn2s_ref[...] + bn2b_ref[...])

        # conv2 + 1x1 skip fused: one K = 3*W*inner + W*C matmul
        lhs2 = jnp.concatenate([tap_lhs(a2), xf], axis=1).astype(jnp.bfloat16)
        out = jnp.dot(lhs2, wb2sk_ref[...], preferred_element_type=jnp.float32)

        o_ref[...] = (out + bfin_ref[...]).astype(o_ref.dtype)

    return kernel


# ---------------------------------------------------------------------------
# Wrappers
# ---------------------------------------------------------------------------
def rcblock_forward_slab(x_slab, params, *, h_img, batch_block=1,
                         out_dtype=jnp.float32):
    """Forward on the lane-dense (n_img*H, W*C) bf16 slab.  Keep this layout
    across consecutive RC blocks to avoid per-block NCHW round-trips; pass
    out_dtype=jnp.bfloat16 to also halve the writeback bytes when downstream
    accepts it."""
    kp = params['kernel']
    n_rows, WC = x_slab.shape
    n_img = n_rows // h_img
    assert n_rows == n_img * h_img and n_img % batch_block == 0
    Mb = batch_block * h_img

    def full(a):
        return pl.BlockSpec(a.shape, lambda b: (0,) * a.ndim)

    # VMEM budget: double-buffered in/out blocks + resident weights + slack.
    weight_keys = ('bn1s', 'bn1b', 'wb1', 'bn2s', 'bn2b', 'wb2sk', 'bfin')
    weight_bytes = sum(int(kp[k].size) * kp[k].dtype.itemsize for k in weight_keys)
    vmem_need = (2 * Mb * WC * 2 +      # bf16 input block, double buffered
                 2 * Mb * WC * 4 +      # f32 output block, double buffered
                 2 * weight_bytes +     # grid-invariant weights
                 (8 << 20))             # live activations + compiler scratch
    vmem_limit = int(min(max(vmem_need, 32 << 20), 48 << 20))  # fits v7x 64 MiB

    grid_spec = pltpu.PrefetchScalarGridSpec(
        num_scalar_prefetch=0,
        grid=(n_img // batch_block,),
        in_specs=[
            pl.BlockSpec((Mb, WC), lambda b: (b, 0)),
            full(kp['bn1s']), full(kp['bn1b']), full(kp['wb1']),
            full(kp['bn2s']), full(kp['bn2b']), full(kp['wb2sk']),
            full(kp['bfin']),
        ],
        out_specs=pl.BlockSpec((Mb, WC), lambda b: (b, 0)),
    )

    return pl.pallas_call(
        _make_rcblock_kernel(h_img),
        out_shape=jax.ShapeDtypeStruct((n_rows, WC), out_dtype),
        grid_spec=grid_spec,
        compiler_params=pltpu.CompilerParams(
            dimension_semantics=("parallel",),
            vmem_limit_bytes=vmem_limit),
    )(x_slab,
      kp['bn1s'], kp['bn1b'], kp['wb1'],
      kp['bn2s'], kp['bn2b'], kp['wb2sk'], kp['bfin'])


def _auto_batch_block(n_img, h_img, target_rows=256):
    """Pick batch_block so Mb = batch_block*H approaches an MXU-friendly M
    (>=256 rows), while dividing the batch and -- when possible -- keeping
    >= 2 grid steps so "parallel" can shard across v7x's two TensorCores."""
    bb = max(1, min(n_img, target_rows // max(h_img, 1)))
    while n_img % bb:
        bb -= 1
    while bb > 1 and n_img // bb < 2:
        bb -= 1
        while n_img % bb:
            bb -= 1
    return bb


def rcblock_forward(x_nchw, params, *, batch_block=None, out_dtype=jnp.float32):
    """NCHW in / NCHW out, like the PyTorch module.
    TODO(synk): in a full network keep the lane-dense slab layout between
    consecutive RC blocks instead of this per-block NCHW<->slab round trip
    (each transpose is a full HBM pass that can cost as much as the kernel)."""
    N, C, H, W = x_nchw.shape
    if batch_block is None:
        batch_block = _auto_batch_block(N, H)
    x_slab = (jnp.transpose(x_nchw, (0, 2, 3, 1))
              .reshape(N * H, W * C).astype(jnp.bfloat16))
    out_slab = rcblock_forward_slab(x_slab, params, h_img=H,
                                    batch_block=batch_block,
                                    out_dtype=out_dtype)
    out = out_slab.astype(jnp.float32).reshape(N, H, W, C)
    return jnp.transpose(out, (0, 3, 1, 2))


# ---------------------------------------------------------------------------
# Deterministic parameter init (synthetic; BN folded to eval-mode scale/shift)
# ---------------------------------------------------------------------------
def init_params(key, C, W):
    inner = max(16, C // 2)

    def bn_fold(k, ch):
        k1, k2, k3, k4 = jax.random.split(k, 4)
        gamma = 1.0 + 0.1 * jax.random.normal(k1, (ch,), jnp.float32)
        beta = 0.1 * jax.random.normal(k2, (ch,), jnp.float32)
        mean = 0.1 * jax.random.normal(k3, (ch,), jnp.float32)
        var = jax.random.uniform(k4, (ch,), jnp.float32, minval=0.5, maxval=1.5)
        scale = gamma * lax.rsqrt(var + BN_EPS)
        shift = beta - mean * scale
        return scale, shift

    keys = jax.random.split(key, 8)
    bn1_scale, bn1_shift = bn_fold(keys[0], C)
    w1 = 0.1 * jax.random.normal(keys[1], (3, 3, C, inner), jnp.float32)   # HWIO
    b1 = 0.1 * jax.random.normal(keys[2], (inner,), jnp.float32)
    bn2_scale, bn2_shift = bn_fold(keys[3], inner)
    w2 = 0.1 * jax.random.normal(keys[4], (3, 3, inner, C), jnp.float32)
    b2 = 0.1 * jax.random.normal(keys[5], (C,), jnp.float32)
    ws = 0.1 * jax.random.normal(keys[6], (C, C), jnp.float32)             # 1x1 [cin,cout]
    bs = 0.1 * jax.random.normal(keys[7], (C,), jnp.float32)

    raw = dict(bn1_scale=bn1_scale, bn1_shift=bn1_shift, w1=w1, b1=b1,
               bn2_scale=bn2_scale, bn2_shift=bn2_shift, w2=w2, b2=b2,
               ws=ws, bs=bs)

    # --- kernel-side packing (all folds done on the host) --------------------
    wb1 = _band_weight(np.asarray(w1), W)                       # (3*W*C, W*inner)
    wb2 = _band_weight(np.asarray(w2), W)                       # (3*W*inner, W*C)
    wsk = np.kron(np.eye(W, dtype=np.float32), np.asarray(ws))  # (W*C, W*C)
    wb2sk = np.concatenate([wb2, wsk], axis=0)                  # conv2 + skip fused along K

    bn2_shift_eff = np.asarray(b1) * np.asarray(bn2_scale) + np.asarray(bn2_shift)
    bias_final = np.asarray(b2) + np.asarray(bs)

    kernelp = dict(
        bn1s=jnp.tile(bn1_scale, W).reshape(1, W * C),
        bn1b=jnp.tile(bn1_shift, W).reshape(1, W * C),
        wb1=jnp.asarray(wb1, jnp.bfloat16),
        bn2s=jnp.tile(bn2_scale, W).reshape(1, W * inner),
        bn2b=jnp.tile(jnp.asarray(bn2_shift_eff, jnp.float32), W).reshape(1, W * inner),
        wb2sk=jnp.asarray(wb2sk, jnp.bfloat16),
        bfin=jnp.tile(jnp.asarray(bias_final, jnp.float32), W).reshape(1, W * C),
    )
    return {'raw': raw, 'kernel': kernelp}


# ---------------------------------------------------------------------------
# Pure-JAX reference with the kernel's numerics mirrored: activations and
# weights are rounded to bf16 before every contraction (the kernel's HBM slab
# and MXU operands are bf16); all other math stays f32.
# ---------------------------------------------------------------------------
def reference_forward(x_nchw, params):
    p = params['raw']
    qw = lambda w: w.astype(jnp.bfloat16).astype(jnp.float32)
    qa = lambda a: a.astype(jnp.bfloat16).astype(jnp.float32)
    dn = ('NHWC', 'HWIO', 'NHWC')
    x = qa(jnp.transpose(x_nchw, (0, 2, 3, 1)).astype(jnp.float32))
    h = _leaky(x * p['bn1_scale'] + p['bn1_shift'])
    h = lax.conv_general_dilated(qa(h), qw(p['w1']), (1, 1), 'SAME',
                                 dimension_numbers=dn) + p['b1']
    h = _leaky(h * p['bn2_scale'] + p['bn2_shift'])
    h = lax.conv_general_dilated(qa(h), qw(p['w2']), (1, 1), 'SAME',
                                 dimension_numbers=dn) + p['b2']
    skip = jnp.einsum('nhwc,cd->nhwd', x, qw(p['ws'])) + p['bs']
    return jnp.transpose(skip + h, (0, 3, 1, 2))


if __name__ == "__main__":
    key = jax.random.PRNGKey(0)
    kx, kp = jax.random.split(key)

    N, C, H, W = 2, 16, 16, 16                 # NCHW, small, like the module
    x = jax.random.normal(kx, (N, C, H, W), jnp.float32)
    params = init_params(kp, C, W)

    ref = reference_forward(x, params)

    # auto batch_block (here -> 1 image per step: keeps >=2 grid steps so
    # "parallel" can use both TensorCores on v7x)
    out = jax.block_until_ready(rcblock_forward(x, params))
    assert out.shape == (N, C, H, W)
    np.testing.assert_allclose(np.asarray(out), np.asarray(ref),
                               rtol=2e-2, atol=2e-2)

    # whole batch per grid step (bigger matmul M; image boundaries handled by
    # the in-kernel row%H masks)
    out2 = jax.block_until_ready(rcblock_forward(x, params, batch_block=2))
    np.testing.assert_allclose(np.asarray(out2), np.asarray(ref),
                               rtol=2e-2, atol=2e-2)

    print("KERNEL_OK")
</pallas_src>

<mosaic_0001>
module attributes {stable_mosaic.version = 11 : i64} {
  func.func @kernel(%arg0: i32, %arg1: memref<16x256xbf16, #tpu.memory_space<vmem>>, %arg2: memref<1x256xf32, #tpu.memory_space<vmem>>, %arg3: memref<1x256xf32, #tpu.memory_space<vmem>>, %arg4: memref<768x256xbf16, #tpu.memory_space<vmem>>, %arg5: memref<1x256xf32, #tpu.memory_space<vmem>>, %arg6: memref<1x256xf32, #tpu.memory_space<vmem>>, %arg7: memref<1024x256xbf16, #tpu.memory_space<vmem>>, %arg8: memref<1x256xf32, #tpu.memory_space<vmem>>, %arg9: memref<16x256xf32, #tpu.memory_space<vmem>>) attributes {dimension_semantics = [#tpu.dimension_semantics<parallel>], iteration_bounds = array<i64: 2>, scalar_prefetch = 0 : i64, scratch_operands = 0 : i64, tpu.core_type = #tpu.core_type<tc>, window_params = [{transform_indices = @transform_0, window_bounds = array<i64: 16, 256>}, {pipeline_mode = #tpu.pipeline_mode<synchronous>, transform_indices = @transform_1, window_bounds = array<i64: 1, 256>}, {pipeline_mode = #tpu.pipeline_mode<synchronous>, transform_indices = @transform_2, window_bounds = array<i64: 1, 256>}, {pipeline_mode = #tpu.pipeline_mode<synchronous>, transform_indices = @transform_3, window_bounds = array<i64: 768, 256>}, {pipeline_mode = #tpu.pipeline_mode<synchronous>, transform_indices = @transform_4, window_bounds = array<i64: 1, 256>}, {pipeline_mode = #tpu.pipeline_mode<synchronous>, transform_indices = @transform_5, window_bounds = array<i64: 1, 256>}, {pipeline_mode = #tpu.pipeline_mode<synchronous>, transform_indices = @transform_6, window_bounds = array<i64: 1024, 256>}, {pipeline_mode = #tpu.pipeline_mode<synchronous>, transform_indices = @transform_7, window_bounds = array<i64: 1, 256>}, {transform_indices = @transform_8, window_bounds = array<i64: 16, 256>}]} {
    %c0 = arith.constant 0 : index
    %c0_0 = arith.constant 0 : index
    %0 = vector.load %arg1[%c0, %c0_0] : memref<16x256xbf16, #tpu.memory_space<vmem>>, vector<16x256xbf16>
    %1 = arith.extf %0 : vector<16x256xbf16> to vector<16x256xf32>
    %2 = tpu.iota {dimensions = array<i32: 0>} : vector<16x1xi32>
    %c16_i32 = arith.constant 16 : i32
    %c0_i32 = arith.constant 0 : i32
    %3 = arith.cmpi eq, %c16_i32, %c0_i32 : i32
    %c1_i32 = arith.constant 1 : i32
    %4 = arith.select %3, %c1_i32, %c16_i32 : i32
    %5 = vector.broadcast %4 : i32 to vector<16x1xi32>
    %6 = arith.remsi %2, %5 : vector<16x1xi32>
    %c0_i32_1 = arith.constant 0 : i32
    %7 = vector.broadcast %c0_i32_1 : i32 to vector<16x1xi32>
    %8 = arith.cmpi ne, %6, %7 : vector<16x1xi32>
    %c0_i32_2 = arith.constant 0 : i32
    %9 = vector.broadcast %c0_i32_2 : i32 to vector<16x1xi32>
    %10 = arith.cmpi slt, %6, %9 : vector<16x1xi32>
    %c0_i32_3 = arith.constant 0 : i32
    %11 = arith.cmpi slt, %4, %c0_i32_3 : i32
    %12 = vector.broadcast %11 : i1 to vector<16x1xi1>
    %13 = vector.broadcast %12 : vector<16x1xi1> to vector<16x1xi1>
    %14 = arith.xori %10, %13 : vector<16x1xi1>
    %15 = arith.andi %14, %8 : vector<16x1xi1>
    %16 = vector.broadcast %4 : i32 to vector<16x1xi32>
    %17 = arith.addi %6, %16 : vector<16x1xi32>
    %18 = arith.select %15, %17, %6 : vector<16x1xi1>, vector<16x1xi32>
    %c0_i32_4 = arith.constant 0 : i32
    %19 = vector.broadcast %c0_i32_4 : i32 to vector<16x1xi32>
    %20 = arith.cmpi ne, %18, %19 : vector<16x1xi32>
    %c15_i32 = arith.constant 15 : i32
    %21 = vector.broadcast %c15_i32 : i32 to vector<16x1xi32>
    %22 = arith.cmpi ne, %18, %21 : vector<16x1xi32>
    %c0_5 = arith.constant 0 : index
    %c0_6 = arith.constant 0 : index
    %23 = vector.load %arg2[%c0_5, %c0_6] : memref<1x256xf32, #tpu.memory_space<vmem>>, vector<1x256xf32>
    %24 = vector.broadcast %23 : vector<1x256xf32> to vector<16x256xf32>
    %25 = arith.mulf %1, %24 : vector<16x256xf32>
    %c0_7 = arith.constant 0 : index
    %c0_8 = arith.constant 0 : index
    %26 = vector.load %arg3[%c0_7, %c0_8] : memref<1x256xf32, #tpu.memory_space<vmem>>, vector<1x256xf32>
    %27 = vector.broadcast %26 : vector<1x256xf32> to vector<16x256xf32>
    %28 = arith.addf %25, %27 : vector<16x256xf32>
    %cst = arith.constant 0.000000e+00 : f32
    %29 = vector.broadcast %cst : f32 to vector<16x256xf32>
    %30 = arith.cmpf oge, %28, %29 : vector<16x256xf32>
    %cst_9 = arith.constant 0.00999999977 : f32
    %31 = vector.broadcast %cst_9 : f32 to vector<16x256xf32>
    %32 = arith.mulf %31, %28 : vector<16x256xf32>
    %33 = arith.select %30, %28, %32 : vector<16x256xi1>, vector<16x256xf32>
    %c1_i32_10 = arith.constant 1 : i32
    %34 = tpu.dynamic_rotate %33 by %c1_i32_10 dim 0 : vector<16x256xf32>, i32 -> vector<16x256xf32>
    %cst_11 = arith.constant 0.000000e+00 : f32
    %35 = vector.shape_cast %20 : vector<16x1xi1> to vector<16x1xi1>
    %36 = vector.broadcast %35 : vector<16x1xi1> to vector<16x256xi1>
    %37 = vector.broadcast %cst_11 : f32 to vector<16x256xf32>
    %38 = arith.select %36, %34, %37 : vector<16x256xi1>, vector<16x256xf32>
    %c15_i32_12 = arith.constant 15 : i32
    %39 = tpu.dynamic_rotate %33 by %c15_i32_12 dim 0 : vector<16x256xf32>, i32 -> vector<16x256xf32>
    %cst_13 = arith.constant 0.000000e+00 : f32
    %40 = vector.shape_cast %22 : vector<16x1xi1> to vector<16x1xi1>
    %41 = vector.broadcast %40 : vector<16x1xi1> to vector<16x256xi1>
    %42 = vector.broadcast %cst_13 : f32 to vector<16x256xf32>
    %43 = arith.select %41, %39, %42 : vector<16x256xi1>, vector<16x256xf32>
    %44 = tpu.concatenate %38, %33, %43 in 1 : vector<16x256xf32>, vector<16x256xf32>, vector<16x256xf32> -> vector<16x768xf32>
    %45 = arith.truncf %44 : vector<16x768xf32> to vector<16x768xbf16>
    %c0_14 = arith.constant 0 : index
    %c0_15 = arith.constant 0 : index
    %46 = vector.load %arg4[%c0_14, %c0_15] : memref<768x256xbf16, #tpu.memory_space<vmem>>, vector<768x256xbf16>
    %cst_16 = arith.constant dense<0.000000e+00> : vector<16x256xf32>
    %47 = tpu.matmul %45, %46, %cst_16 {dimension_numbers = #tpu.dot_dimension_numbers<[1], [0], [0], [1], [0, 0, 1, 1], [], []>} : vector<16x768xbf16>, vector<768x256xbf16>, vector<16x256xf32> -> vector<16x256xf32>
    %c0_17 = arith.constant 0 : index
    %c0_18 = arith.constant 0 : index
    %48 = vector.load %arg5[%c0_17, %c0_18] : memref<1x256xf32, #tpu.memory_space<vmem>>, vector<1x256xf32>
    %49 = vector.broadcast %48 : vector<1x256xf32> to vector<16x256xf32>
    %50 = arith.mulf %47, %49 : vector<16x256xf32>
    %c0_19 = arith.constant 0 : index
    %c0_20 = arith.constant 0 : index
    %51 = vector.load %arg6[%c0_19, %c0_20] : memref<1x256xf32, #tpu.memory_space<vmem>>, vector<1x256xf32>
    %52 = vector.broadcast %51 : vector<1x256xf32> to vector<16x256xf32>
    %53 = arith.addf %50, %52 : vector<16x256xf32>
    %cst_21 = arith.constant 0.000000e+00 : f32
    %54 = vector.broadcast %cst_21 : f32 to vector<16x256xf32>
    %55 = arith.cmpf oge, %53, %54 : vector<16x256xf32>
    %cst_22 = arith.constant 0.00999999977 : f32
    %56 = vector.broadcast %cst_22 : f32 to vector<16x256xf32>
    %57 = arith.mulf %56, %53 : vector<16x256xf32>
    %58 = arith.select %55, %53, %57 : vector<16x256xi1>, vector<16x256xf32>
    %c1_i32_23 = arith.constant 1 : i32
    %59 = tpu.dynamic_rotate %58 by %c1_i32_23 dim 0 : vector<16x256xf32>, i32 -> vector<16x256xf32>
    %cst_24 = arith.constant 0.000000e+00 : f32
    %60 = vector.shape_cast %20 : vector<16x1xi1> to vector<16x1xi1>
    %61 = vector.broadcast %60 : vector<16x1xi1> to vector<16x256xi1>
    %62 = vector.broadcast %cst_24 : f32 to vector<16x256xf32>
    %63 = arith.select %61, %59, %62 : vector<16x256xi1>, vector<16x256xf32>
    %c15_i32_25 = arith.constant 15 : i32
    %64 = tpu.dynamic_rotate %58 by %c15_i32_25 dim 0 : vector<16x256xf32>, i32 -> vector<16x256xf32>
    %cst_26 = arith.constant 0.000000e+00 : f32
    %65 = vector.shape_cast %22 : vector<16x1xi1> to vector<16x1xi1>
    %66 = vector.broadcast %65 : vector<16x1xi1> to vector<16x256xi1>
    %67 = vector.broadcast %cst_26 : f32 to vector<16x256xf32>
    %68 = arith.select %66, %64, %67 : vector<16x256xi1>, vector<16x256xf32>
    %69 = tpu.concatenate %63, %58, %68 in 1 : vector<16x256xf32>, vector<16x256xf32>, vector<16x256xf32> -> vector<16x768xf32>
    %70 = tpu.concatenate %69, %1 in 1 : vector<16x768xf32>, vector<16x256xf32> -> vector<16x1024xf32>
    %71 = arith.truncf %70 : vector<16x1024xf32> to vector<16x1024xbf16>
    %c0_27 = arith.constant 0 : index
    %c0_28 = arith.constant 0 : index
    %72 = vector.load %arg7[%c0_27, %c0_28] : memref<1024x256xbf16, #tpu.memory_space<vmem>>, vector<1024x256xbf16>
    %cst_29 = arith.constant dense<0.000000e+00> : vector<16x256xf32>
    %73 = tpu.matmul %71, %72, %cst_29 {dimension_numbers = #tpu.dot_dimension_numbers<[1], [0], [0], [1], [0, 0, 1, 1], [], []>} : vector<16x1024xbf16>, vector<1024x256xbf16>, vector<16x256xf32> -> vector<16x256xf32>
    %c0_30 = arith.constant 0 : index
    %c0_31 = arith.constant 0 : index
    %74 = vector.load %arg8[%c0_30, %c0_31] : memref<1x256xf32, #tpu.memory_space<vmem>>, vector<1x256xf32>
    %75 = vector.broadcast %74 : vector<1x256xf32> to vector<16x256xf32>
    %76 = arith.addf %73, %75 : vector<16x256xf32>
    %c0_32 = arith.constant 0 : index
    %c0_33 = arith.constant 0 : index
    %77 = vector.load %arg9[%c0_32, %c0_33] : memref<16x256xf32, #tpu.memory_space<vmem>>, vector<16x256xf32>
    tpu.vector_store %arg9[%c0_32, %c0_33], %76 {strides = array<i32>} : memref<16x256xf32, #tpu.memory_space<vmem>>, vector<16x256xf32>,
    return
  }
  func.func @transform_0(%arg0: i32) -> (i32, i32) {
    %c0_i32 = arith.constant 0 : i32
    %c0_i32_0 = arith.constant 0 : i32
    return %arg0, %c0_i32 : i32, i32
  }
  func.func @transform_1(%arg0: i32) -> (i32, i32) {
    %c0_i32 = arith.constant 0 : i32
    %c0_i32_0 = arith.constant 0 : i32
    %c0_i32_1 = arith.constant 0 : i32
    return %c0_i32, %c0_i32_0 : i32, i32
  }
  func.func @transform_2(%arg0: i32) -> (i32, i32) {
    %c0_i32 = arith.constant 0 : i32
    %c0_i32_0 = arith.constant 0 : i32
    %c0_i32_1 = arith.constant 0 : i32
    return %c0_i32, %c0_i32_0 : i32, i32
  }
  func.func @transform_3(%arg0: i32) -> (i32, i32) {
    %c0_i32 = arith.constant 0 : i32
    %c0_i32_0 = arith.constant 0 : i32
    %c0_i32_1 = arith.constant 0 : i32
    return %c0_i32, %c0_i32_0 : i32, i32
  }
  func.func @transform_4(%arg0: i32) -> (i32, i32) {
    %c0_i32 = arith.constant 0 : i32
    %c0_i32_0 = arith.constant 0 : i32
    %c0_i32_1 = arith.constant 0 : i32
    return %c0_i32, %c0_i32_0 : i32, i32
  }
  func.func @transform_5(%arg0: i32) -> (i32, i32) {
    %c0_i32 = arith.constant 0 : i32
    %c0_i32_0 = arith.constant 0 : i32
    %c0_i32_1 = arith.constant 0 : i32
    return %c0_i32, %c0_i32_0 : i32, i32
  }
  func.func @transform_6(%arg0: i32) -> (i32, i32) {
    %c0_i32 = arith.constant 0 : i32
    %c0_i32_0 = arith.constant 0 : i32
    %c0_i32_1 = arith.constant 0 : i32
    return %c0_i32, %c0_i32_0 : i32, i32
  }
  func.func @transform_7(%arg0: i32) -> (i32, i32) {
    %c0_i32 = arith.constant 0 : i32
    %c0_i32_0 = arith.constant 0 : i32
    %c0_i32_1 = arith.constant 0 : i32
    return %c0_i32, %c0_i32_0 : i32, i32
  }
  func.func @transform_8(%arg0: i32) -> (i32, i32) {
    %c0_i32 = arith.constant 0 : i32
    %c0_i32_0 = arith.constant 0 : i32
    return %arg0, %c0_i32 : i32, i32
  }
}

</mosaic_0001>

<llo_original>
// kernel: tpu_custom_call.1
$region0: #{tpu_custom_call.1}
  #allocation0 [shape = 'u32[]', space=smem, size = 0x4, offset = 0x4, fixed_abs, tag = 'smem constant byte address 0x4 - core index']
  #allocation1 [shape = 'u32[72,128]{1,0:T(1,128)}', space=vmem, size = 0x9000, scoped, tag = 'internal scratch']
  %s0 = inlined_call_operand.hbm [shape: bf16[32,256], index: 0, kind: input, shape index: {}]
  %s1 = inlined_call_operand.hbm [shape: f32[1,256], index: 1, kind: input, shape index: {}]
  %s2 = inlined_call_operand.hbm [shape: f32[1,256], index: 2, kind: input, shape index: {}]
  %s3 = inlined_call_operand.hbm [shape: bf16[768,256], index: 3, kind: input, shape index: {}]
  %s4 = inlined_call_operand.vmem [shape: f32[1,256], index: 4, kind: input, shape index: {}]
  %s5 = inlined_call_operand.vmem [shape: f32[1,256], index: 5, kind: input, shape index: {}]
  %s6 = inlined_call_operand.hbm [shape: bf16[1024,256], index: 6, kind: input, shape index: {}]
  %s7 = inlined_call_operand.vmem [shape: f32[1,256], index: 7, kind: input, shape index: {}]
  %s8 = inlined_call_operand.hbm [shape: f32[32,256], index: 8, kind: output, shape index: {}]
  %s9 = sld [smem:[#allocation0]]
  $region85: #{tpu_custom_call.1} parent=0
    _
  %s11 = ssub.s32 1, %s9
  %s12 = scalar_select 0, %s11, %s9
  $region1: #{tpu_custom_call.1} parent=0
    #allocation2 [shape = 'u8[16384]{0}', space=vmem, size = 0x4000, scoped, tag = 'input window, operand 0']
    #allocation3 [shape = 's32[2]{0}', space=sflag, size = 0x8, scoped, tag = 'scoped memory for tpu_custom_call.1']
    #allocation4 [shape = 's32[2]{0}', space=sflag, size = 0x8, scoped, tag = 'scoped memory for tpu_custom_call.1']
    #allocation5 [shape = 'u8[1024]{0}', space=vmem, size = 0x400, scoped, tag = 'input window, operand 1, single buffered']
    #allocation6 [shape = 's32[1]{0}', space=sflag, size = 0x4, scoped, tag = 'scoped memory for tpu_custom_call.1']
    #allocation7 [shape = 'u8[1024]{0}', space=vmem, size = 0x400, scoped, tag = 'input window, operand 2, single buffered']
    #allocation8 [shape = 'u8[393216]{0}', space=vmem, size = 0x60000, scoped, tag = 'input window, operand 3, single buffered']
    #allocation9 [shape = 's32[1]{0}', space=sflag, size = 0x4, scoped, tag = 'scoped memory for tpu_custom_call.1']
    #allocation10 [shape = 'u8[524288]{0}', space=vmem, size = 0x80000, scoped, tag = 'input window, operand 6, single buffered']
    #allocation11 [shape = 'u8[32768]{0}', space=vmem, size = 0x8000, scoped, tag = 'output window, operand 0']
    %13 = vsyncpa [#allocation3], 0
    %s14 = scalar_lea.sflag [#allocation3], 1
    %15 = vsyncpa %s14, 0
    %16 = vsyncpa [#allocation6], 0
    %17 = vsyncpa [#allocation9], 0
    %18 = vsyncpa [#allocation4], 0
    %s19 = scalar_lea.sflag [#allocation4], 1
    %20 = vsyncpa %s19, 0
    loop: start=0, step=1, limit=4
    $region2: #{tpu_custom_call.1} parent=1 // loop_pre_header
      _
    $region3: #{tpu_custom_call.1} parent=1 // loop_header
      %s22 = sphi 0, %s26
      %p23 = scmp.ge.s32.totalorder %s22, 4
      %s32 = sphi 0, %s34
      %s35 = sphi 0, %s32
      %s36 = sphi 0, %s35
      %s52 = sphi 0, %s36
      %s56 = sphi 0, %s56
      %s58 = sphi 0, %s56
      %s59 = sphi 0, %s58
      %s73 = sphi 0, %s59
      %s77 = sphi 0, %s77
      %s79 = sphi 0, %s77
      %s80 = sphi 0, %s79
      %s94 = sphi 0, %s80
      %s98 = sphi 0, %s98
      %s100 = sphi 0, %s98
      %s101 = sphi 0, %s100
      %s115 = sphi 0, %s101
      %s119 = sphi 0, %s119
      %s121 = sphi 0, %s119
      %s122 = sphi 0, %s121
      %s136 = sphi 0, %s122
      %s140 = sphi 0, %s140
      %s142 = sphi 0, %s140
      %s143 = sphi 0, %s142
      %s157 = sphi 0, %s143
      %s161 = sphi 0, %s161
      %s163 = sphi 0, %s161
      %s164 = sphi 0, %s163
      %s178 = sphi 0, %s164
      %s182 = sphi 0, %s182
      %s184 = sphi 0, %s182
      %s185 = sphi 0, %s184
      %s199 = sphi 0, %s185
      %s205 = sphi 0, %s207
      %s208 = sphi 0, %s205
      %s209 = sphi 0, %s208
      %s225 = sphi 0, %s209
    $region4: #{tpu_custom_call.1} parent=1 // loop_header_branch
      %25 = sbr.rel (%p23) target = $region8
    $region5: #{tpu_custom_call.1} parent=1 // loop_body
      %s27 = ssub.s32 %s22, 1
      %s28 = ssub.s32 %s22, 2
      %s29 = sadd.s32 %s22, 1
      %s30 = ssub.s32 %s22, %s29
      %p31 = scmp.eq.s32.totalorder %s30, 0
      %s33 = sadd.s32 %s32, 1
      %s34 = scalar_select %p31, %s32, %s33
      %p37 = pneg %p31
      %p38 = scmp.eq.s32.totalorder %s22, 1
      %p39 = por %p37, %p38
      %p40 = scmp.ne.s32.totalorder %s32, %s35
      %p41 = scmp.eq.s32.totalorder %s22, 0
      %p42 = por %p40, %p41
      %p43 = scmp.ne.s32.totalorder %s32, %s35
      %p44 = scmp.eq.s32.totalorder %s27, 1
      %p45 = por %p43, %p44
      %p46 = scmp.ne.s32.totalorder %s35, %s36
      %p47 = scmp.eq.s32.totalorder %s27, 0
      %p48 = por %p46, %p47
      %p49 = scmp.ne.s32.totalorder %s35, %s36
      %p50 = scmp.eq.s32.totalorder %s28, 1
      %p51 = por %p49, %p50
      %p53 = scmp.ne.s32.totalorder %s36, %s52
      %p54 = scmp.eq.s32.totalorder %s28, 0
      %p55 = por %p53, %p54
      %s57 = sadd.s32 %s56, 1
      %p60 = scmp.eq.s32.totalorder %s22, 1
      %p61 = scmp.ne.s32.totalorder %s56, %s58
      %p62 = scmp.eq.s32.totalorder %s22, 0
      %p63 = por %p61, %p62
      %p64 = scmp.ne.s32.totalorder %s56, %s58
      %p65 = scmp.eq.s32.totalorder %s27, 1
      %p66 = por %p64, %p65
      %p67 = scmp.ne.s32.totalorder %s58, %s59
      %p68 = scmp.eq.s32.totalorder %s27, 0
      %p69 = por %p67, %p68
      %p70 = scmp.ne.s32.totalorder %s58, %s59
      %p71 = scmp.eq.s32.totalorder %s28, 1
      %p72 = por %p70, %p71
      %p74 = scmp.ne.s32.totalorder %s59, %s73
      %p75 = scmp.eq.s32.totalorder %s28, 0
      %p76 = por %p74, %p75
      %s78 = sadd.s32 %s77, 1
      %p81 = scmp.eq.s32.totalorder %s22, 1
      %p82 = scmp.ne.s32.totalorder %s77, %s79
      %p83 = scmp.eq.s32.totalorder %s22, 0
      %p84 = por %p82, %p83
      %p85 = scmp.ne.s32.totalorder %s77, %s79
      %p86 = scmp.eq.s32.totalorder %s27, 1
      %p87 = por %p85, %p86
      %p88 = scmp.ne.s32.totalorder %s79, %s80
      %p89 = scmp.eq.s32.totalorder %s27, 0
      %p90 = por %p88, %p89
      %p91 = scmp.ne.s32.totalorder %s79, %s80
      %p92 = scmp.eq.s32.totalorder %s28, 1
      %p93 = por %p91, %p92
      %p95 = scmp.ne.s32.totalorder %s80, %s94
      %p96 = scmp.eq.s32.totalorder %s28, 0
      %p97 = por %p95, %p96
      %s99 = sadd.s32 %s98, 1
      %p102 = scmp.eq.s32.totalorder %s22, 1
      %p103 = scmp.ne.s32.totalorder %s98, %s100
      %p104 = scmp.eq.s32.totalorder %s22, 0
      %p105 = por %p103, %p104
      %p106 = scmp.ne.s32.totalorder %s98, %s100
      %p107 = scmp.eq.s32.totalorder %s27, 1
      %p108 = por %p106, %p107
      %p109 = scmp.ne.s32.totalorder %s100, %s101
      %p110 = scmp.eq.s32.totalorder %s27, 0
      %p111 = por %p109, %p110
      %p112 = scmp.ne.s32.totalorder %s100, %s101
      %p113 = scmp.eq.s32.totalorder %s28, 1
      %p114 = por %p112, %p113
      %p116 = scmp.ne.s32.totalorder %s101, %s115
      %p117 = scmp.eq.s32.totalorder %s28, 0
      %p118 = por %p116, %p117
      %s120 = sadd.s32 %s119, 1
      %p123 = scmp.eq.s32.totalorder %s22, 1
      %p124 = scmp.ne.s32.totalorder %s119, %s121
      %p125 = scmp.eq.s32.totalorder %s22, 0
      %p126 = por %p124, %p125
      %p127 = scmp.ne.s32.totalorder %s119, %s121
      %p128 = scmp.eq.s32.totalorder %s27, 1
      %p129 = por %p127, %p128
      %p130 = scmp.ne.s32.totalorder %s121, %s122
      %p131 = scmp.eq.s32.totalorder %s27, 0
      %p132 = por %p130, %p131
      %p133 = scmp.ne.s32.totalorder %s121, %s122
      %p134 = scmp.eq.s32.totalorder %s28, 1
      %p135 = por %p133, %p134
      %p137 = scmp.ne.s32.totalorder %s122, %s136
      %p138 = scmp.eq.s32.totalorder %s28, 0
      %p139 = por %p137, %p138
      %s141 = sadd.s32 %s140, 1
      %p144 = scmp.eq.s32.totalorder %s22, 1
      %p145 = scmp.ne.s32.totalorder %s140, %s142
      %p146 = scmp.eq.s32.totalorder %s22, 0
      %p147 = por %p145, %p146
      %p148 = scmp.ne.s32.totalorder %s140, %s142
      %p149 = scmp.eq.s32.totalorder %s27, 1
      %p150 = por %p148, %p149
      %p151 = scmp.ne.s32.totalorder %s142, %s143
      %p152 = scmp.eq.s32.totalorder %s27, 0
      %p153 = por %p151, %p152
      %p154 = scmp.ne.s32.totalorder %s142, %s143
      %p155 = scmp.eq.s32.totalorder %s28, 1
      %p156 = por %p154, %p155
      %p158 = scmp.ne.s32.totalorder %s143, %s157
      %p159 = scmp.eq.s32.totalorder %s28, 0
      %p160 = por %p158, %p159
      %s162 = sadd.s32 %s161, 1
      %p165 = scmp.eq.s32.totalorder %s22, 1
      %p166 = scmp.ne.s32.totalorder %s161, %s163
      %p167 = scmp.eq.s32.totalorder %s22, 0
      %p168 = por %p166, %p167
      %p169 = scmp.ne.s32.totalorder %s161, %s163
      %p170 = scmp.eq.s32.totalorder %s27, 1
      %p171 = por %p169, %p170
      %p172 = scmp.ne.s32.totalorder %s163, %s164
      %p173 = scmp.eq.s32.totalorder %s27, 0
      %p174 = por %p172, %p173
      %p175 = scmp.ne.s32.totalorder %s163, %s164
      %p176 = scmp.eq.s32.totalorder %s28, 1
      %p177 = por %p175, %p176
      %p179 = scmp.ne.s32.totalorder %s164, %s178
      %p180 = scmp.eq.s32.totalorder %s28, 0
      %p181 = por %p179, %p180
      %s183 = sadd.s32 %s182, 1
      %p186 = scmp.eq.s32.totalorder %s22, 1
      %p187 = scmp.ne.s32.totalorder %s182, %s184
      %p188 = scmp.eq.s32.totalorder %s22, 0
      %p189 = por %p187, %p188
      %p190 = scmp.ne.s32.totalorder %s182, %s184
      %p191 = scmp.eq.s32.totalorder %s27, 1
      %p192 = por %p190, %p191
      %p193 = scmp.ne.s32.totalorder %s184, %s185
      %p194 = scmp.eq.s32.totalorder %s27, 0
      %p195 = por %p193, %p194
      %p196 = scmp.ne.s32.totalorder %s184, %s185
      %p197 = scmp.eq.s32.totalorder %s28, 1
      %p198 = por %p196, %p197
      %p200 = scmp.ne.s32.totalorder %s185, %s199
      %p201 = scmp.eq.s32.totalorder %s28, 0
      %p202 = por %p200, %p201
      %s203 = ssub.s32 %s22, %s29
      %p204 = scmp.eq.s32.totalorder %s203, 0
      %s206 = sadd.s32 %s205, 1
      %s207 = scalar_select %p204, %s205, %s206
      %p210 = pneg %p204
      %p211 = scmp.eq.s32.totalorder %s22, 1
      %p212 = por %p210, %p211
      %p213 = scmp.ne.s32.totalorder %s205, %s208
      %p214 = scmp.eq.s32.totalorder %s22, 0
      %p215 = por %p213, %p214
      %p216 = scmp.ne.s32.totalorder %s205, %s208
      %p217 = scmp.eq.s32.totalorder %s27, 1
      %p218 = por %p216, %p217
      %p219 = scmp.ne.s32.totalorder %s208, %s209
      %p220 = scmp.eq.s32.totalorder %s27, 0
      %p221 = por %p219, %p220
      %p222 = scmp.ne.s32.totalorder %s208, %s209
      %p223 = scmp.eq.s32.totalorder %s28, 1
      %p224 = por %p222, %p223
      %p226 = scmp.ne.s32.totalorder %s209, %s225
      %p227 = scmp.eq.s32.totalorder %s28, 0
      %p228 = por %p226, %p227
      %p229 = scmp.le.s32.totalorder 1, %s22
      %p230 = scmp.lt.s32.totalorder %s22, 3
      %p231 = pnand %p229, %p230
      %p232 = pneg %p231
      // Predicated region
      $region9: #{tpu_custom_call.1} parent=5 // pred_check
        _
      $region10: #{tpu_custom_call.1} parent=5 // pred_check_branch
        %234 = sbr.rel (%p231) target = $region12
      $region11: #{tpu_custom_call.1} parent=5 // pred_region
        %s235 = ssub.s32 %s22, 1
        // Predicated region
        $region13: #{tpu_custom_call.1} parent=11 // pred_check
          %p236 = pneg %p69
        $region14: #{tpu_custom_call.1} parent=11 // pred_check_branch
          %238 = sbr.rel (%p236) target = $region16
        $region15: #{tpu_custom_call.1} parent=11 // pred_region
          %240 = vsyncadd [#allocation6], 0
          %s242 = sshll.u32 %s1, 4
          %s243 = int_to_ptr.hbm [resolvable:$true] %s242
          %s244 = sshll.u32 [#allocation5], 4
          %s245 = int_to_ptr.vmem [resolvable:$true] %s244
          %247 = dma.hbm_to_vmem [thread:$0]  %s243, 32, %s245, [#allocation6]
        $region16: #{tpu_custom_call.1} parent=11 // pred_fallthru
          _
        // Predicated region
        $region17: #{tpu_custom_call.1} parent=11 // pred_check
          %p248 = pneg %p90
        $region18: #{tpu_custom_call.1} parent=11 // pred_check_branch
          %250 = sbr.rel (%p248) target = $region20
        $region19: #{tpu_custom_call.1} parent=11 // pred_region
          %252 = vsyncadd [#allocation6], 0
          %s254 = sshll.u32 %s2, 4
          %s255 = int_to_ptr.hbm [resolvable:$true] %s254
          %s256 = sshll.u32 [#allocation7], 4
          %s257 = int_to_ptr.vmem [resolvable:$true] %s256
          %259 = dma.hbm_to_vmem [thread:$0]  %s255, 32, %s257, [#allocation6]
        $region20: #{tpu_custom_call.1} parent=11 // pred_fallthru
          _
        // Predicated region
        $region21: #{tpu_custom_call.1} parent=11 // pred_check
          %p260 = pneg %p111
        $region22: #{tpu_custom_call.1} parent=11 // pred_check_branch
          %262 = sbr.rel (%p260) target = $region24
        $region23: #{tpu_custom_call.1} parent=11 // pred_region
          %264 = vsyncadd [#allocation9], 0
          %s265 = sshll.u32 %s3, 4
          %s266 = int_to_ptr.hbm [resolvable:$true] %s265
          %s267 = sshll.u32 [#allocation8], 4
          %s268 = int_to_ptr.vmem [resolvable:$true] %s267
          %273 = dma.hbm_to_vmem [thread:$0]  %s266, 12288, %s268, [#allocation9], 128, 128, 8
        $region24: #{tpu_custom_call.1} parent=11 // pred_fallthru
          _
        // Predicated region
        $region25: #{tpu_custom_call.1} parent=11 // pred_check
          %p274 = pneg %p132
        $region26: #{tpu_custom_call.1} parent=11 // pred_check_branch
          %276 = sbr.rel (%p274) target = $region28
        $region27: #{tpu_custom_call.1} parent=11 // pred_region
          _
        $region28: #{tpu_custom_call.1} parent=11 // pred_fallthru
          _
        // Predicated region
        $region29: #{tpu_custom_call.1} parent=11 // pred_check
          %p277 = pneg %p153
        $region30: #{tpu_custom_call.1} parent=11 // pred_check_branch
          %279 = sbr.rel (%p277) target = $region32
        $region31: #{tpu_custom_call.1} parent=11 // pred_region
          _
        $region32: #{tpu_custom_call.1} parent=11 // pred_fallthru
          _
        // Predicated region
        $region33: #{tpu_custom_call.1} parent=11 // pred_check
          %p280 = pneg %p174
        $region34: #{tpu_custom_call.1} parent=11 // pred_check_branch
          %282 = sbr.rel (%p280) target = $region36
        $region35: #{tpu_custom_call.1} parent=11 // pred_region
          %284 = vsyncadd [#allocation9], 0
          %s285 = sshll.u32 %s6, 4
          %s286 = int_to_ptr.hbm [resolvable:$true] %s285
          %s287 = sshll.u32 [#allocation10], 4
          %s288 = int_to_ptr.vmem [resolvable:$true] %s287
          %293 = dma.hbm_to_vmem [thread:$0]  %s286, 16384, %s288, [#allocation9], 128, 128, 8
        $region36: #{tpu_custom_call.1} parent=11 // pred_fallthru
          _
        // Predicated region
        $region37: #{tpu_custom_call.1} parent=11 // pred_check
          %p294 = pneg %p195
        $region38: #{tpu_custom_call.1} parent=11 // pred_check_branch
          %296 = sbr.rel (%p294) target = $region40
        $region39: #{tpu_custom_call.1} parent=11 // pred_region
          _
        $region40: #{tpu_custom_call.1} parent=11 // pred_fallthru
          _
      $region12: #{tpu_custom_call.1} parent=5 // pred_fallthru
        _
      %p297 = scmp.lt.s32.totalorder %s22, 2
      // Predicated region
      $region41: #{tpu_custom_call.1} parent=5 // pred_check
        %p298 = pneg %p297
      $region42: #{tpu_custom_call.1} parent=5 // pred_check_branch
        %300 = sbr.rel (%p298) target = $region44
      $region43: #{tpu_custom_call.1} parent=5 // pred_region
        // Predicated region
        $region45: #{tpu_custom_call.1} parent=43 // pred_check
          %p301 = pneg %p42
        $region46: #{tpu_custom_call.1} parent=43 // pred_check_branch
          %303 = sbr.rel (%p301) target = $region48
        $region47: #{tpu_custom_call.1} parent=43 // pred_region
          %s304 = sand.u32 %s32, 1
          %s305 = scalar_lea.sflag [#allocation3], %s304
          %s306 = sand.u32 %s32, 1
          %s307 = smul.addr %s306, 16
          %s308 = scalar_lea.vmem [#allocation2], %s307
          %s309 = smul.u32 2, %s22
          %311 = vsyncadd %s305, 0
          %s312 = smul.addr %s309, 2
          %s313 = smul.addr %s312, 4
          %s314 = scalar_lea.hbm %s0, %s313
          %s315 = sshll.u32 %s314, 4
          %s316 = int_to_ptr.hbm [resolvable:$true] %s315
          %s317 = sshll.u32 %s308, 4
          %s318 = int_to_ptr.vmem [resolvable:$true] %s317
          %323 = dma.hbm_to_vmem [thread:$0]  %s316, 256, %s318, %s305, 128, 128, 8
        $region48: #{tpu_custom_call.1} parent=43 // pred_fallthru
          _
      $region44: #{tpu_custom_call.1} parent=5 // pred_fallthru
        _
      %p324 = scmp.le.s32.totalorder 1, %s22
      %p325 = scmp.lt.s32.totalorder %s22, 3
      %p326 = pnand %p324, %p325
      %p327 = pneg %p326
      // Predicated region
      $region49: #{tpu_custom_call.1} parent=5 // pred_check
        _
      $region50: #{tpu_custom_call.1} parent=5 // pred_check_branch
        %329 = sbr.rel (%p326) target = $region52
      $region51: #{tpu_custom_call.1} parent=5 // pred_region
        %s330 = ssub.s32 %s22, 1
        %s331 = sand.u32 %s35, 1
        %s332 = scalar_lea.sflag [#allocation3], %s331
        %s333 = sand.u32 %s35, 1
        %s334 = smul.addr %s333, 16
        %s335 = scalar_lea.vmem [#allocation2], %s334
        // Predicated region
        $region53: #{tpu_custom_call.1} parent=51 // pred_check
          %p336 = pneg %p48
        $region54: #{tpu_custom_call.1} parent=51 // pred_check_branch
          %338 = sbr.rel (%p336) target = $region56
        $region55: #{tpu_custom_call.1} parent=51 // pred_region
          %340 = dma.done %s332, 256
        $region56: #{tpu_custom_call.1} parent=51 // pred_fallthru
          _
        // Predicated region
        $region57: #{tpu_custom_call.1} parent=51 // pred_check
          %p341 = pneg %p69
        $region58: #{tpu_custom_call.1} parent=51 // pred_check_branch
          %343 = sbr.rel (%p341) target = $region60
        $region59: #{tpu_custom_call.1} parent=51 // pred_region
          %345 = dma.done [#allocation6], 32
        $region60: #{tpu_custom_call.1} parent=51 // pred_fallthru
          _
        // Predicated region
        $region61: #{tpu_custom_call.1} parent=51 // pred_check
          %p346 = pneg %p90
        $region62: #{tpu_custom_call.1} parent=51 // pred_check_branch
          %348 = sbr.rel (%p346) target = $region64
        $region63: #{tpu_custom_call.1} parent=51 // pred_region
          %350 = dma.done [#allocation6], 32
        $region64: #{tpu_custom_call.1} parent=51 // pred_fallthru
          _
        // Predicated region
        $region65: #{tpu_custom_call.1} parent=51 // pred_check
          %p351 = pneg %p111
        $region66: #{tpu_custom_call.1} parent=51 // pred_check_branch
          %353 = sbr.rel (%p351) target = $region68
        $region67: #{tpu_custom_call.1} parent=51 // pred_region
          %355 = dma.done [#allocation9], 12288
        $region68: #{tpu_custom_call.1} parent=51 // pred_fallthru
          _
        // Predicated region
        $region69: #{tpu_custom_call.1} parent=51 // pred_check
          %p356 = pneg %p174
        $region70: #{tpu_custom_call.1} parent=51 // pred_check_branch
          %358 = sbr.rel (%p356) target = $region72
        $region71: #{tpu_custom_call.1} parent=51 // pred_region
          %360 = dma.done [#allocation9], 16384
        $region72: #{tpu_custom_call.1} parent=51 // pred_fallthru
          _
        %s361 = sand.u32 %s35, 1
        %s362 = scalar_lea.sflag [#allocation3], %s361
        %s363 = sand.u32 %s35, 1
        %s364 = smul.addr %s363, 16
        %s365 = scalar_lea.vmem [#allocation2], %s364
        %p366 = pneg %p48
        %p367 = pneg %p45
        %p368 = pneg %p69
        %p369 = pneg %p66
        %p370 = pneg %p90
        %p371 = pneg %p87
        %p372 = pneg %p111
        %p373 = pneg %p108
        %p374 = pneg %p132
        %p375 = pneg %p129
        %p376 = pneg %p153
        %p377 = pneg %p150
        %p378 = pneg %p174
        %p379 = pneg %p171
        %p380 = pneg %p195
        %p381 = pneg %p192
        %p382 = pneg %p221
        %p383 = pneg %p218
        %s384 = sand.u32 %s208, 1
        %s385 = scalar_lea.sflag [#allocation4], %s384
        %s386 = sand.u32 %s208, 1
        %s387 = smul.addr %s386, 32
        %s388 = scalar_lea.vmem [#allocation11], %s387
        %s389 = smul.u32 2, %s27
        %s390 = smul.u32 2, %s27
        %v391 = vld [vmem:[%s335] sm:$0xff]
        %v392 = vld [vmem:[%s335 + $0x8] sm:$0xff]
        %v393 = vunpack.c.l.bf16 %v391
        %v394 = vunpack.c.h.bf16 %v391
        %v395 = vunpack.c.l.bf16 %v392
        %v396 = vunpack.c.h.bf16 %v392
        %v397 = vlaneseq
        %v398 = vshrl.u32 %v397, 7
        %v399 = vadd.s32 %v398, 8
        %vm400 = vcmp.lt.s32.totalorder %v398, 0
        %v401 = vsub.s32 0, %v398
        %v402 = vsel %vm400, %v401, %v398
        %v403 = vshrl.u32 %v402, 4
        %v404 = vand.u32 %v402, 15
        %v405 = vsub.s32 0, %v404
        %v406 = vsel %vm400, %v405, %v404
        %vm407 = vcmp.lt.s32.totalorder %v399, 0
        %v408 = vsub.s32 0, %v399
        %v409 = vsel %vm407, %v408, %v399
        %v410 = vshrl.u32 %v409, 4
        %v411 = vand.u32 %v409, 15
        %v412 = vsub.s32 0, %v411
        %v413 = vsel %vm407, %v412, %v411
        %vm414 = vcmp.ne.s32.totalorder %v406, 0
        %vm415 = vcmp.ne.s32.totalorder %v413, 0
        %vm416 = vcmp.lt.s32.totalorder %v406, 0
        %vm417 = vcmp.lt.s32.totalorder %v413, 0
        %vm418 = vmand %vm416, %vm414
        %vm419 = vmand %vm417, %vm415
        %v420 = vadd.s32 %v406, 16
        %v421 = vadd.s32 %v413, 16
        %v422 = vsel %vm418, %v420, %v406
        %v423 = vsel %vm419, %v421, %v413
        %vm424 = vcmp.ne.s32.totalorder %v422, 0
        %vm425 = vcmp.ne.s32.totalorder %v423, 0
        %vm426 = vcmp.ne.s32.totalorder %v422, 15
        %vm427 = vcmp.ne.s32.totalorder %v423, 15
        %v428 = vld [vmem:[#allocation5] sm:$0x3]
        %v430 = vperm.slane %v428, 0
        %v431 = vperm.slane %v428, 1
        %v434 = vmul.f32 %v393, %v430
        %v435 = vmul.f32 %v394, %v431
        %v436 = vmul.f32 %v395, %v430
        %v437 = vmul.f32 %v396, %v431
        %v438 = vld [vmem:[#allocation7] sm:$0x3]
        %v440 = vperm.slane %v438, 0
        %v441 = vperm.slane %v438, 1
        %v444 = vadd.f32 %v434, %v440
        %v445 = vadd.f32 %v435, %v441
        %v446 = vadd.f32 %v436, %v440
        %v447 = vadd.f32 %v437, %v441
        %vm448 = vcmp.ge.f32.partialorder %v444, 0.0
        %vm449 = vcmp.ge.f32.partialorder %v445, 0.0
        %vm450 = vcmp.ge.f32.partialorder %v446, 0.0
        %vm451 = vcmp.ge.f32.partialorder %v447, 0.0
        %v452 = vmul.f32 %v444, 0.01
        %v453 = vmul.f32 %v445, 0.01
        %v454 = vmul.f32 %v446, 0.01
        %v455 = vmul.f32 %v447, 0.01
        %v456 = vsel %vm448, %v444, %v452
        %v457 = vsel %vm449, %v445, %v453
        %v458 = vsel %vm450, %v446, %v454
        %v459 = vsel %vm451, %v447, %v455
        %v460 = vrot.slane %v456, 7
        %v461 = vrot.slane %v457, 7
        %v462 = vrot.slane %v458, 7
        %v463 = vrot.slane %v459, 7
        %vm464 = vcmp.lt.s32.totalorder %v398, 1
        %v465 = vsel %vm464, %v460, %v462
        %v466 = vsel %vm464, %v461, %v463
        %v467 = vsel %vm464, %v462, %v460
        %v468 = vsel %vm464, %v463, %v461
        %v469 = vsel %vm424, 1, 0
        %v470 = vsel %vm425, 1, 0
        %vm471 = vcmp.eq.s32.totalorder %v469, 1
        %vm472 = vcmp.eq.s32.totalorder %v470, 1
        %v473 = vsel %vm471, %v467, 0.0
        %v474 = vsel %vm471, %v468, 0.0
        %v475 = vsel %vm472, %v465, 0.0
        %v476 = vsel %vm472, %v466, 0.0
        %v477 = vrot.slane %v456, 1
        %v478 = vrot.slane %v457, 1
        %v479 = vrot.slane %v458, 1
        %v480 = vrot.slane %v459, 1
        %vm481 = vcmp.lt.s32.totalorder %v398, 7
        %v482 = vsel %vm481, %v477, %v479
        %v483 = vsel %vm481, %v478, %v480
        %v484 = vsel %vm481, %v479, %v477
        %v485 = vsel %vm481, %v480, %v478
        %v486 = vsel %vm426, 1, 0
        %v487 = vsel %vm427, 1, 0
        %vm488 = vcmp.eq.s32.totalorder %v486, 1
        %vm489 = vcmp.eq.s32.totalorder %v487, 1
        %v490 = vsel %vm488, %v482, 0.0
        %v491 = vsel %vm488, %v483, 0.0
        %v492 = vsel %vm489, %v484, 0.0
        %v493 = vsel %vm489, %v485, 0.0
        %v494 = vpack.c.bf16 %v475, %v473
        %v495 = vpack.c.bf16 %v476, %v474
        %v496 = vpack.c.bf16 %v458, %v456
        %v497 = vpack.c.bf16 %v459, %v457
        %v498 = vpack.c.bf16 %v492, %v490
        %v499 = vpack.c.bf16 %v493, %v491
        %v500 = vld [vmem:[#allocation8] sm:$0xff]
        %v501 = vld [vmem:[#allocation8 + $0x8] sm:$0xff]
        %v502 = vld [vmem:[#allocation8 + $0x10] sm:$0xff]
        %v503 = vld [vmem:[#allocation8 + $0x18] sm:$0xff]
        %v504 = vld [vmem:[#allocation8 + $0x20] sm:$0xff]
        %v505 = vld [vmem:[#allocation8 + $0x28] sm:$0xff]
        %v506 = vld [vmem:[#allocation8 + $0x30] sm:$0xff]
        %v507 = vld [vmem:[#allocation8 + $0x38] sm:$0xff]
        %v508 = vld [vmem:[#allocation8 + $0x40] sm:$0xff]
        %v509 = vld [vmem:[#allocation8 + $0x48] sm:$0xff]
        %v510 = vld [vmem:[#allocation8 + $0x50] sm:$0xff]
        %v511 = vld [vmem:[#allocation8 + $0x58] sm:$0xff]
        %v512 = vld [vmem:[#allocation8 + $0x60] sm:$0xff]
        %v513 = vld [vmem:[#allocation8 + $0x68] sm:$0xff]
        %v514 = vld [vmem:[#allocation8 + $0x70] sm:$0xff]
        %v515 = vld [vmem:[#allocation8 + $0x78] sm:$0xff]
        %v516 = vld [vmem:[#allocation8 + $0x80] sm:$0xff]
        %v517 = vld [vmem:[#allocation8 + $0x88] sm:$0xff]
        %v518 = vld [vmem:[#allocation8 + $0x90] sm:$0xff]
        %v519 = vld [vmem:[#allocation8 + $0x98] sm:$0xff]
        %v520 = vld [vmem:[#allocation8 + $0xa0] sm:$0xff]
        %v521 = vld [vmem:[#allocation8 + $0xa8] sm:$0xff]
        %v522 = vld [vmem:[#allocation8 + $0xb0] sm:$0xff]
        %v523 = vld [vmem:[#allocation8 + $0xb8] sm:$0xff]
        %v524 = vld [vmem:[#allocation8 + $0xc0] sm:$0xff]
        %v525 = vld [vmem:[#allocation8 + $0xc8] sm:$0xff]
        %v526 = vld [vmem:[#allocation8 + $0xd0] sm:$0xff]
        %v527 = vld [vmem:[#allocation8 + $0xd8] sm:$0xff]
        %v528 = vld [vmem:[#allocation8 + $0xe0] sm:$0xff]
        %v529 = vld [vmem:[#allocation8 + $0xe8] sm:$0xff]
        %v530 = vld [vmem:[#allocation8 + $0xf0] sm:$0xff]
        %v531 = vld [vmem:[#allocation8 + $0xf8] sm:$0xff]
        %v532 = vld [vmem:[#allocation8 + $0x100] sm:$0xff]
        %v533 = vld [vmem:[#allocation8 + $0x108] sm:$0xff]
        %v534 = vld [vmem:[#allocation8 + $0x110] sm:$0xff]
        %v535 = vld [vmem:[#allocation8 + $0x118] sm:$0xff]
        %v536 = vld [vmem:[#allocation8 + $0x120] sm:$0xff]
        %v537 = vld [vmem:[#allocation8 + $0x128] sm:$0xff]
        %v538 = vld [vmem:[#allocation8 + $0x130] sm:$0xff]
        %v539 = vld [vmem:[#allocation8 + $0x138] sm:$0xff]
        %v540 = vld [vmem:[#allocation8 + $0x140] sm:$0xff]
        %v541 = vld [vmem:[#allocation8 + $0x148] sm:$0xff]
        %v542 = vld [vmem:[#allocation8 + $0x150] sm:$0xff]
        %v543 = vld [vmem:[#allocation8 + $0x158] sm:$0xff]
        %v544 = vld [vmem:[#allocation8 + $0x160] sm:$0xff]
        %v545 = vld [vmem:[#allocation8 + $0x168] sm:$0xff]
        %v546 = vld [vmem:[#allocation8 + $0x170] sm:$0xff]
        %v547 = vld [vmem:[#allocation8 + $0x178] sm:$0xff]
        %v548 = vld [vmem:[#allocation8 + $0x180] sm:$0xff]
        %v549 = vld [vmem:[#allocation8 + $0x188] sm:$0xff]
        %v550 = vld [vmem:[#allocation8 + $0x190] sm:$0xff]
        %v551 = vld [vmem:[#allocation8 + $0x198] sm:$0xff]
        %v552 = vld [vmem:[#allocation8 + $0x1a0] sm:$0xff]
        %v553 = vld [vmem:[#allocation8 + $0x1a8] sm:$0xff]
        %v554 = vld [vmem:[#allocation8 + $0x1b0] sm:$0xff]
        %v555 = vld [vmem:[#allocation8 + $0x1b8] sm:$0xff]
        %v556 = vld [vmem:[#allocation8 + $0x1c0] sm:$0xff]
        %v557 = vld [vmem:[#allocation8 + $0x1c8] sm:$0xff]
        %v558 = vld [vmem:[#allocation8 + $0x1d0] sm:$0xff]
        %v559 = vld [vmem:[#allocation8 + $0x1d8] sm:$0xff]
        %v560 = vld [vmem:[#allocation8 + $0x1e0] sm:$0xff]
        %v561 = vld [vmem:[#allocation8 + $0x1e8] sm:$0xff]
        %v562 = vld [vmem:[#allocation8 + $0x1f0] sm:$0xff]
        %v563 = vld [vmem:[#allocation8 + $0x1f8] sm:$0xff]
        %v564 = vld [vmem:[#allocation8 + $0x200] sm:$0xff]
        %v565 = vld [vmem:[#allocation8 + $0x208] sm:$0xff]
        %v566 = vld [vmem:[#allocation8 + $0x210] sm:$0xff]
        %v567 = vld [vmem:[#allocation8 + $0x218] sm:$0xff]
        %v568 = vld [vmem:[#allocation8 + $0x220] sm:$0xff]
        %v569 = vld [vmem:[#allocation8 + $0x228] sm:$0xff]
        %v570 = vld [vmem:[#allocation8 + $0x230] sm:$0xff]
        %v571 = vld [vmem:[#allocation8 + $0x238] sm:$0xff]
        %v572 = vld [vmem:[#allocation8 + $0x240] sm:$0xff]
        %v573 = vld [vmem:[#allocation8 + $0x248] sm:$0xff]
        %v574 = vld [vmem:[#allocation8 + $0x250] sm:$0xff]
        %v575 = vld [vmem:[#allocation8 + $0x258] sm:$0xff]
        %v576 = vld [vmem:[#allocation8 + $0x260] sm:$0xff]
        %v577 = vld [vmem:[#allocation8 + $0x268] sm:$0xff]
        %v578 = vld [vmem:[#allocation8 + $0x270] sm:$0xff]
        %v579 = vld [vmem:[#allocation8 + $0x278] sm:$0xff]
        %v580 = vld [vmem:[#allocation8 + $0x280] sm:$0xff]
        %v581 = vld [vmem:[#allocation8 + $0x288] sm:$0xff]
        %v582 = vld [vmem:[#allocation8 + $0x290] sm:$0xff]
        %v583 = vld [vmem:[#allocation8 + $0x298] sm:$0xff]
        %v584 = vld [vmem:[#allocation8 + $0x2a0] sm:$0xff]
        %v585 = vld [vmem:[#allocation8 + $0x2a8] sm:$0xff]
        %v586 = vld [vmem:[#allocation8 + $0x2b0] sm:$0xff]
        %v587 = vld [vmem:[#allocation8 + $0x2b8] sm:$0xff]
        %v588 = vld [vmem:[#allocation8 + $0x2c0] sm:$0xff]
        %v589 = vld [vmem:[#allocation8 + $0x2c8] sm:$0xff]
        %v590 = vld [vmem:[#allocation8 + $0x2d0] sm:$0xff]
        %v591 = vld [vmem:[#allocation8 + $0x2d8] sm:$0xff]
        %v592 = vld [vmem:[#allocation8 + $0x2e0] sm:$0xff]
        %v593 = vld [vmem:[#allocation8 + $0x2e8] sm:$0xff]
        %v594 = vld [vmem:[#allocation8 + $0x2f0] sm:$0xff]
        %v595 = vld [vmem:[#allocation8 + $0x2f8] sm:$0xff]
        %v692 = vunpack.c.l.b16 %v500
        %v693 = vunpack.c.h.b16 %v500
        %v694 = vunpack.c.l.b16 %v501
        %v695 = vunpack.c.h.b16 %v501
        %v696 = vunpack.c.l.b16 %v502
        %v697 = vunpack.c.h.b16 %v502
        %v698 = vunpack.c.l.b16 %v503
        %v699 = vunpack.c.h.b16 %v503
        %v700 = vunpack.c.l.b16 %v504
        %v701 = vunpack.c.h.b16 %v504
        %v702 = vunpack.c.l.b16 %v505
        %v703 = vunpack.c.h.b16 %v505
        %v704 = vunpack.c.l.b16 %v506
        %v705 = vunpack.c.h.b16 %v506
        %v706 = vunpack.c.l.b16 %v507
        %v707 = vunpack.c.h.b16 %v507
        %v708 = vunpack.c.l.b16 %v508
        %v709 = vunpack.c.h.b16 %v508
        %v710 = vunpack.c.l.b16 %v509
        %v711 = vunpack.c.h.b16 %v509
        %v712 = vunpack.c.l.b16 %v510
        %v713 = vunpack.c.h.b16 %v510
        %v714 = vunpack.c.l.b16 %v511
        %v715 = vunpack.c.h.b16 %v511
        %v716 = vunpack.c.l.b16 %v512
        %v717 = vunpack.c.h.b16 %v512
        %v718 = vunpack.c.l.b16 %v513
        %v719 = vunpack.c.h.b16 %v513
        %v720 = vunpack.c.l.b16 %v514
        %v721 = vunpack.c.h.b16 %v514
        %v722 = vunpack.c.l.b16 %v515
        %v723 = vunpack.c.h.b16 %v515
        %v724 = vunpack.c.l.b16 %v516
        %v725 = vunpack.c.h.b16 %v516
        %v726 = vunpack.c.l.b16 %v517
        %v727 = vunpack.c.h.b16 %v517
        %v728 = vunpack.c.l.b16 %v518
        %v729 = vunpack.c.h.b16 %v518
        %v730 = vunpack.c.l.b16 %v519
        %v731 = vunpack.c.h.b16 %v519
        %v732 = vunpack.c.l.b16 %v520
        %v733 = vunpack.c.h.b16 %v520
        %v734 = vunpack.c.l.b16 %v521
        %v735 = vunpack.c.h.b16 %v521
        %v736 = vunpack.c.l.b16 %v522
        %v737 = vunpack.c.h.b16 %v522
        %v738 = vunpack.c.l.b16 %v523
        %v739 = vunpack.c.h.b16 %v523
        %v740 = vunpack.c.l.b16 %v524
        %v741 = vunpack.c.h.b16 %v524
        %v742 = vunpack.c.l.b16 %v525
        %v743 = vunpack.c.h.b16 %v525
        %v744 = vunpack.c.l.b16 %v526
        %v745 = vunpack.c.h.b16 %v526
        %v746 = vunpack.c.l.b16 %v527
        %v747 = vunpack.c.h.b16 %v527
        %v748 = vunpack.c.l.b16 %v528
        %v749 = vunpack.c.h.b16 %v528
        %v750 = vunpack.c.l.b16 %v529
        %v751 = vunpack.c.h.b16 %v529
        %v752 = vunpack.c.l.b16 %v530
        %v753 = vunpack.c.h.b16 %v530
        %v754 = vunpack.c.l.b16 %v531
        %v755 = vunpack.c.h.b16 %v531
        %v756 = vunpack.c.l.b16 %v532
        %v757 = vunpack.c.h.b16 %v532
        %v758 = vunpack.c.l.b16 %v533
        %v759 = vunpack.c.h.b16 %v533
        %v760 = vunpack.c.l.b16 %v534
        %v761 = vunpack.c.h.b16 %v534
        %v762 = vunpack.c.l.b16 %v535
        %v763 = vunpack.c.h.b16 %v535
        %v764 = vunpack.c.l.b16 %v536
        %v765 = vunpack.c.h.b16 %v536
        %v766 = vunpack.c.l.b16 %v537
        %v767 = vunpack.c.h.b16 %v537
        %v768 = vunpack.c.l.b16 %v538
        %v769 = vunpack.c.h.b16 %v538
        %v770 = vunpack.c.l.b16 %v539
        %v771 = vunpack.c.h.b16 %v539
        %v772 = vunpack.c.l.b16 %v540
        %v773 = vunpack.c.h.b16 %v540
        %v774 = vunpack.c.l.b16 %v541
        %v775 = vunpack.c.h.b16 %v541
        %v776 = vunpack.c.l.b16 %v542
        %v777 = vunpack.c.h.b16 %v542
        %v778 = vunpack.c.l.b16 %v543
        %v779 = vunpack.c.h.b16 %v543
        %v780 = vunpack.c.l.b16 %v544
        %v781 = vunpack.c.h.b16 %v544
        %v782 = vunpack.c.l.b16 %v545
        %v783 = vunpack.c.h.b16 %v545
        %v784 = vunpack.c.l.b16 %v546
        %v785 = vunpack.c.h.b16 %v546
        %v786 = vunpack.c.l.b16 %v547
        %v787 = vunpack.c.h.b16 %v547
        %v788 = vunpack.c.l.b16 %v548
        %v789 = vunpack.c.h.b16 %v548
        %v790 = vunpack.c.l.b16 %v549
        %v791 = vunpack.c.h.b16 %v549
        %v792 = vunpack.c.l.b16 %v550
        %v793 = vunpack.c.h.b16 %v550
        %v794 = vunpack.c.l.b16 %v551
        %v795 = vunpack.c.h.b16 %v551
        %v796 = vunpack.c.l.b16 %v552
        %v797 = vunpack.c.h.b16 %v552
        %v798 = vunpack.c.l.b16 %v553
        %v799 = vunpack.c.h.b16 %v553
        %v800 = vunpack.c.l.b16 %v554
        %v801 = vunpack.c.h.b16 %v554
        %v802 = vunpack.c.l.b16 %v555
        %v803 = vunpack.c.h.b16 %v555
        %v804 = vunpack.c.l.b16 %v556
        %v805 = vunpack.c.h.b16 %v556
        %v806 = vunpack.c.l.b16 %v557
        %v807 = vunpack.c.h.b16 %v557
        %v808 = vunpack.c.l.b16 %v558
        %v809 = vunpack.c.h.b16 %v558
        %v810 = vunpack.c.l.b16 %v559
        %v811 = vunpack.c.h.b16 %v559
        %v812 = vunpack.c.l.b16 %v560
        %v813 = vunpack.c.h.b16 %v560
        %v814 = vunpack.c.l.b16 %v561
        %v815 = vunpack.c.h.b16 %v561
        %v816 = vunpack.c.l.b16 %v562
        %v817 = vunpack.c.h.b16 %v562
        %v818 = vunpack.c.l.b16 %v563
        %v819 = vunpack.c.h.b16 %v563
        %v820 = vunpack.c.l.b16 %v564
        %v821 = vunpack.c.h.b16 %v564
        %v822 = vunpack.c.l.b16 %v565
        %v823 = vunpack.c.h.b16 %v565
        %v824 = vunpack.c.l.b16 %v566
        %v825 = vunpack.c.h.b16 %v566
        %v826 = vunpack.c.l.b16 %v567
        %v827 = vunpack.c.h.b16 %v567
        %v828 = vunpack.c.l.b16 %v568
        %v829 = vunpack.c.h.b16 %v568
        %v830 = vunpack.c.l.b16 %v569
        %v831 = vunpack.c.h.b16 %v569
        %v832 = vunpack.c.l.b16 %v570
        %v833 = vunpack.c.h.b16 %v570
        %v834 = vunpack.c.l.b16 %v571
        %v835 = vunpack.c.h.b16 %v571
        %v836 = vunpack.c.l.b16 %v572
        %v837 = vunpack.c.h.b16 %v572
        %v838 = vunpack.c.l.b16 %v573
        %v839 = vunpack.c.h.b16 %v573
        %v840 = vunpack.c.l.b16 %v574
        %v841 = vunpack.c.h.b16 %v574
        %v842 = vunpack.c.l.b16 %v575
        %v843 = vunpack.c.h.b16 %v575
        %v844 = vunpack.c.l.b16 %v576
        %v845 = vunpack.c.h.b16 %v576
        %v846 = vunpack.c.l.b16 %v577
        %v847 = vunpack.c.h.b16 %v577
        %v848 = vunpack.c.l.b16 %v578
        %v849 = vunpack.c.h.b16 %v578
        %v850 = vunpack.c.l.b16 %v579
        %v851 = vunpack.c.h.b16 %v579
        %v852 = vunpack.c.l.b16 %v580
        %v853 = vunpack.c.h.b16 %v580
        %v854 = vunpack.c.l.b16 %v581
        %v855 = vunpack.c.h.b16 %v581
        %v856 = vunpack.c.l.b16 %v582
        %v857 = vunpack.c.h.b16 %v582
        %v858 = vunpack.c.l.b16 %v583
        %v859 = vunpack.c.h.b16 %v583
        %v860 = vunpack.c.l.b16 %v584
        %v861 = vunpack.c.h.b16 %v584
        %v862 = vunpack.c.l.b16 %v585
        %v863 = vunpack.c.h.b16 %v585
        %v864 = vunpack.c.l.b16 %v586
        %v865 = vunpack.c.h.b16 %v586
        %v866 = vunpack.c.l.b16 %v587
        %v867 = vunpack.c.h.b16 %v587
        %v868 = vunpack.c.l.b16 %v588
        %v869 = vunpack.c.h.b16 %v588
        %v870 = vunpack.c.l.b16 %v589
        %v871 = vunpack.c.h.b16 %v589
        %v872 = vunpack.c.l.b16 %v590
        %v873 = vunpack.c.h.b16 %v590
        %v874 = vunpack.c.l.b16 %v591
        %v875 = vunpack.c.h.b16 %v591
        %v876 = vunpack.c.l.b16 %v592
        %v877 = vunpack.c.h.b16 %v592
        %v878 = vunpack.c.l.b16 %v593
        %v879 = vunpack.c.h.b16 %v593
        %v880 = vunpack.c.l.b16 %v594
        %v881 = vunpack.c.h.b16 %v594
        %v882 = vunpack.c.l.b16 %v595
        %v883 = vunpack.c.h.b16 %v595
        %v884 = vpack.c.b16 %v694, %v692
        %v885 = vpack.c.b16 %v695, %v693
        %v886 = vpack.c.b16 %v698, %v696
        %v887 = vpack.c.b16 %v699, %v697
        %v888 = vpack.c.b16 %v702, %v700
        %v889 = vpack.c.b16 %v703, %v701
        %v890 = vpack.c.b16 %v706, %v704
        %v891 = vpack.c.b16 %v707, %v705
        %v892 = vpack.c.b16 %v710, %v708
        %v893 = vpack.c.b16 %v711, %v709
        %v894 = vpack.c.b16 %v714, %v712
        %v895 = vpack.c.b16 %v715, %v713
        %v896 = vpack.c.b16 %v718, %v716
        %v897 = vpack.c.b16 %v719, %v717
        %v898 = vpack.c.b16 %v722, %v720
        %v899 = vpack.c.b16 %v723, %v721
        %v900 = vpack.c.b16 %v726, %v724
        %v901 = vpack.c.b16 %v727, %v725
        %v902 = vpack.c.b16 %v730, %v728
        %v903 = vpack.c.b16 %v731, %v729
        %v904 = vpack.c.b16 %v734, %v732
        %v905 = vpack.c.b16 %v735, %v733
        %v906 = vpack.c.b16 %v738, %v736
        %v907 = vpack.c.b16 %v739, %v737
        %v908 = vpack.c.b16 %v742, %v740
        %v909 = vpack.c.b16 %v743, %v741
        %v910 = vpack.c.b16 %v746, %v744
        %v911 = vpack.c.b16 %v747, %v745
        %v912 = vpack.c.b16 %v750, %v748
        %v913 = vpack.c.b16 %v751, %v749
        %v914 = vpack.c.b16 %v754, %v752
        %v915 = vpack.c.b16 %v755, %v753
        %v916 = vpack.c.b16 %v758, %v756
        %v917 = vpack.c.b16 %v759, %v757
        %v918 = vpack.c.b16 %v762, %v760
        %v919 = vpack.c.b16 %v763, %v761
        %v920 = vpack.c.b16 %v766, %v764
        %v921 = vpack.c.b16 %v767, %v765
        %v922 = vpack.c.b16 %v770, %v768
        %v923 = vpack.c.b16 %v771, %v769
        %v924 = vpack.c.b16 %v774, %v772
        %v925 = vpack.c.b16 %v775, %v773
        %v926 = vpack.c.b16 %v778, %v776
        %v927 = vpack.c.b16 %v779, %v777
        %v928 = vpack.c.b16 %v782, %v780
        %v929 = vpack.c.b16 %v783, %v781
        %v930 = vpack.c.b16 %v786, %v784
        %v931 = vpack.c.b16 %v787, %v785
        %v932 = vpack.c.b16 %v790, %v788
        %v933 = vpack.c.b16 %v791, %v789
        %v934 = vpack.c.b16 %v794, %v792
        %v935 = vpack.c.b16 %v795, %v793
        %v936 = vpack.c.b16 %v798, %v796
        %v937 = vpack.c.b16 %v799, %v797
        %v938 = vpack.c.b16 %v802, %v800
        %v939 = vpack.c.b16 %v803, %v801
        %v940 = vpack.c.b16 %v806, %v804
        %v941 = vpack.c.b16 %v807, %v805
        %v942 = vpack.c.b16 %v810, %v808
        %v943 = vpack.c.b16 %v811, %v809
        %v944 = vpack.c.b16 %v814, %v812
        %v945 = vpack.c.b16 %v815, %v813
        %v946 = vpack.c.b16 %v818, %v816
        %v947 = vpack.c.b16 %v819, %v817
        %v948 = vpack.c.b16 %v822, %v820
        %v949 = vpack.c.b16 %v823, %v821
        %v950 = vpack.c.b16 %v826, %v824
        %v951 = vpack.c.b16 %v827, %v825
        %v952 = vpack.c.b16 %v830, %v828
        %v953 = vpack.c.b16 %v831, %v829
        %v954 = vpack.c.b16 %v834, %v832
        %v955 = vpack.c.b16 %v835, %v833
        %v956 = vpack.c.b16 %v838, %v836
        %v957 = vpack.c.b16 %v839, %v837
        %v958 = vpack.c.b16 %v842, %v840
        %v959 = vpack.c.b16 %v843, %v841
        %v960 = vpack.c.b16 %v846, %v844
        %v961 = vpack.c.b16 %v847, %v845
        %v962 = vpack.c.b16 %v850, %v848
        %v963 = vpack.c.b16 %v851, %v849
        %v964 = vpack.c.b16 %v854, %v852
        %v965 = vpack.c.b16 %v855, %v853
        %v966 = vpack.c.b16 %v858, %v856
        %v967 = vpack.c.b16 %v859, %v857
        %v968 = vpack.c.b16 %v862, %v860
        %v969 = vpack.c.b16 %v863, %v861
        %v970 = vpack.c.b16 %v866, %v864
        %v971 = vpack.c.b16 %v867, %v865
        %v972 = vpack.c.b16 %v870, %v868
        %v973 = vpack.c.b16 %v871, %v869
        %v974 = vpack.c.b16 %v874, %v872
        %v975 = vpack.c.b16 %v875, %v873
        %v976 = vpack.c.b16 %v878, %v876
        %v977 = vpack.c.b16 %v879, %v877
        %v978 = vpack.c.b16 %v882, %v880
        %v979 = vpack.c.b16 %v883, %v881
        %1076 = vmatpush.bf16.msra.mxu0 %v898
        %1077 = vmatpush.bf16.msra.mxu0 %v896
        %1078 = vmatpush.bf16.msra.mxu0 %v894
        %1079 = vmatpush.bf16.msra.mxu0 %v892
        %1080 = vmatpush.bf16.msra.mxu0 %v890
        %1081 = vmatpush.bf16.msra.mxu0 %v888
        %1082 = vmatpush.bf16.msra.mxu0 %v886
        %1083 = vmatpush.bf16.msra.mxu0 %v884
        %1084 = vmatmul.bf16.gmra.mxu0 %v494
        %v1085 = vpop.f32.mrf.mxu0
        %v1086 = vadd.f32 0.0, %v1085
        %v1087 = vpop.f32.mrf.mxu0
        %v1088 = vadd.f32 0.0, %v1087
        %1089 = vdwg.mxu0
        %1090 = vmatpush.bf16.msra.mxu0 %v914
        %1091 = vmatpush.bf16.msra.mxu0 %v912
        %1092 = vmatpush.bf16.msra.mxu0 %v910
        %1093 = vmatpush.bf16.msra.mxu0 %v908
        %1094 = vmatpush.bf16.msra.mxu0 %v906
        %1095 = vmatpush.bf16.msra.mxu0 %v904
        %1096 = vmatpush.bf16.msra.mxu0 %v902
        %1097 = vmatpush.bf16.msra.mxu0 %v900
        %1098 = vmatmul.bf16.gmra.mxu0 %v495
        %v1099 = vpop.f32.mrf.mxu0
        %v1100 = vadd.f32 %v1086, %v1099
        %v1101 = vpop.f32.mrf.mxu0
        %v1102 = vadd.f32 %v1088, %v1101
        %1103 = vdwg.mxu0
        %1104 = vmatpush.bf16.msra.mxu0 %v930
        %1105 = vmatpush.bf16.msra.mxu0 %v928
        %1106 = vmatpush.bf16.msra.mxu0 %v926
        %1107 = vmatpush.bf16.msra.mxu0 %v924
        %1108 = vmatpush.bf16.msra.mxu0 %v922
        %1109 = vmatpush.bf16.msra.mxu0 %v920
        %1110 = vmatpush.bf16.msra.mxu0 %v918
        %1111 = vmatpush.bf16.msra.mxu0 %v916
        %1112 = vmatmul.bf16.gmra.mxu0 %v496
        %v1113 = vpop.f32.mrf.mxu0
        %v1114 = vadd.f32 %v1100, %v1113
        %v1115 = vpop.f32.mrf.mxu0
        %v1116 = vadd.f32 %v1102, %v1115
        %1117 = vdwg.mxu0
        %1118 = vmatpush.bf16.msra.mxu0 %v946
        %1119 = vmatpush.bf16.msra.mxu0 %v944
        %1120 = vmatpush.bf16.msra.mxu0 %v942
        %1121 = vmatpush.bf16.msra.mxu0 %v940
        %1122 = vmatpush.bf16.msra.mxu0 %v938
        %1123 = vmatpush.bf16.msra.mxu0 %v936
        %1124 = vmatpush.bf16.msra.mxu0 %v934
        %1125 = vmatpush.bf16.msra.mxu0 %v932
        %1126 = vmatmul.bf16.gmra.mxu0 %v497
        %v1127 = vpop.f32.mrf.mxu0
        %v1128 = vadd.f32 %v1114, %v1127
        %v1129 = vpop.f32.mrf.mxu0
        %v1130 = vadd.f32 %v1116, %v1129
        %1131 = vdwg.mxu0
        %1132 = vmatpush.bf16.msra.mxu0 %v962
        %1133 = vmatpush.bf16.msra.mxu0 %v960
        %1134 = vmatpush.bf16.msra.mxu0 %v958
        %1135 = vmatpush.bf16.msra.mxu0 %v956
        %1136 = vmatpush.bf16.msra.mxu0 %v954
        %1137 = vmatpush.bf16.msra.mxu0 %v952
        %1138 = vmatpush.bf16.msra.mxu0 %v950
        %1139 = vmatpush.bf16.msra.mxu0 %v948
        %1140 = vmatmul.bf16.gmra.mxu0 %v498
        %v1141 = vpop.f32.mrf.mxu0
        %v1142 = vadd.f32 %v1128, %v1141
        %v1143 = vpop.f32.mrf.mxu0
        %v1144 = vadd.f32 %v1130, %v1143
        %1145 = vdwg.mxu0
        %1146 = vmatpush.bf16.msra.mxu0 %v978
        %1147 = vmatpush.bf16.msra.mxu0 %v976
        %1148 = vmatpush.bf16.msra.mxu0 %v974
        %1149 = vmatpush.bf16.msra.mxu0 %v972
        %1150 = vmatpush.bf16.msra.mxu0 %v970
        %1151 = vmatpush.bf16.msra.mxu0 %v968
        %1152 = vmatpush.bf16.msra.mxu0 %v966
        %1153 = vmatpush.bf16.msra.mxu0 %v964
        %1154 = vmatmul.bf16.gmra.mxu0 %v499
        %v1155 = vpop.f32.mrf.mxu0
        %v1156 = vadd.f32 %v1142, %v1155
        %v1157 = vpop.f32.mrf.mxu0
        %v1158 = vadd.f32 %v1144, %v1157
        %1159 = vdwg.mxu0
        %1160 = vmatpush.bf16.msra.mxu0 %v899
        %1161 = vmatpush.bf16.msra.mxu0 %v897
        %1162 = vmatpush.bf16.msra.mxu0 %v895
        %1163 = vmatpush.bf16.msra.mxu0 %v893
        %1164 = vmatpush.bf16.msra.mxu0 %v891
        %1165 = vmatpush.bf16.msra.mxu0 %v889
        %1166 = vmatpush.bf16.msra.mxu0 %v887
        %1167 = vmatpush.bf16.msra.mxu0 %v885
        %1168 = vmatmul.bf16.gmra.mxu0 %v494
        %v1169 = vpop.f32.mrf.mxu0
        %v1170 = vadd.f32 0.0, %v1169
        %v1171 = vpop.f32.mrf.mxu0
        %v1172 = vadd.f32 0.0, %v1171
        %1173 = vdwg.mxu0
        %1174 = vmatpush.bf16.msra.mxu0 %v915
        %1175 = vmatpush.bf16.msra.mxu0 %v913
        %1176 = vmatpush.bf16.msra.mxu0 %v911
        %1177 = vmatpush.bf16.msra.mxu0 %v909
        %1178 = vmatpush.bf16.msra.mxu0 %v907
        %1179 = vmatpush.bf16.msra.mxu0 %v905
        %1180 = vmatpush.bf16.msra.mxu0 %v903
        %1181 = vmatpush.bf16.msra.mxu0 %v901
        %1182 = vmatmul.bf16.gmra.mxu0 %v495
        %v1183 = vpop.f32.mrf.mxu0
        %v1184 = vadd.f32 %v1170, %v1183
        %v1185 = vpop.f32.mrf.mxu0
        %v1186 = vadd.f32 %v1172, %v1185
        %1187 = vdwg.mxu0
        %1188 = vmatpush.bf16.msra.mxu0 %v931
        %1189 = vmatpush.bf16.msra.mxu0 %v929
        %1190 = vmatpush.bf16.msra.mxu0 %v927
        %1191 = vmatpush.bf16.msra.mxu0 %v925
        %1192 = vmatpush.bf16.msra.mxu0 %v923
        %1193 = vmatpush.bf16.msra.mxu0 %v921
        %1194 = vmatpush.bf16.msra.mxu0 %v919
        %1195 = vmatpush.bf16.msra.mxu0 %v917
        %1196 = vmatmul.bf16.gmra.mxu0 %v496
        %v1197 = vpop.f32.mrf.mxu0
        %v1198 = vadd.f32 %v1184, %v1197
        %v1199 = vpop.f32.mrf.mxu0
        %v1200 = vadd.f32 %v1186, %v1199
        %1201 = vdwg.mxu0
        %1202 = vmatpush.bf16.msra.mxu0 %v947
        %1203 = vmatpush.bf16.msra.mxu0 %v945
        %1204 = vmatpush.bf16.msra.mxu0 %v943
        %1205 = vmatpush.bf16.msra.mxu0 %v941
        %1206 = vmatpush.bf16.msra.mxu0 %v939
        %1207 = vmatpush.bf16.msra.mxu0 %v937
        %1208 = vmatpush.bf16.msra.mxu0 %v935
        %1209 = vmatpush.bf16.msra.mxu0 %v933
        %1210 = vmatmul.bf16.gmra.mxu0 %v497
        %v1211 = vpop.f32.mrf.mxu0
        %v1212 = vadd.f32 %v1198, %v1211
        %v1213 = vpop.f32.mrf.mxu0
        %v1214 = vadd.f32 %v1200, %v1213
        %1215 = vdwg.mxu0
        %1216 = vmatpush.bf16.msra.mxu0 %v963
        %1217 = vmatpush.bf16.msra.mxu0 %v961
        %1218 = vmatpush.bf16.msra.mxu0 %v959
        %1219 = vmatpush.bf16.msra.mxu0 %v957
        %1220 = vmatpush.bf16.msra.mxu0 %v955
        %1221 = vmatpush.bf16.msra.mxu0 %v953
        %1222 = vmatpush.bf16.msra.mxu0 %v951
        %1223 = vmatpush.bf16.msra.mxu0 %v949
        %1224 = vmatmul.bf16.gmra.mxu0 %v498
        %v1225 = vpop.f32.mrf.mxu0
        %v1226 = vadd.f32 %v1212, %v1225
        %v1227 = vpop.f32.mrf.mxu0
        %v1228 = vadd.f32 %v1214, %v1227
        %1229 = vdwg.mxu0
        %1230 = vmatpush.bf16.msra.mxu0 %v979
        %1231 = vmatpush.bf16.msra.mxu0 %v977
        %1232 = vmatpush.bf16.msra.mxu0 %v975
        %1233 = vmatpush.bf16.msra.mxu0 %v973
        %1234 = vmatpush.bf16.msra.mxu0 %v971
        %1235 = vmatpush.bf16.msra.mxu0 %v969
        %1236 = vmatpush.bf16.msra.mxu0 %v967
        %1237 = vmatpush.bf16.msra.mxu0 %v965
        %1238 = vmatmul.bf16.gmra.mxu0 %v499
        %v1239 = vpop.f32.mrf.mxu0
        %v1240 = vadd.f32 %v1226, %v1239
        %v1241 = vpop.f32.mrf.mxu0
        %v1242 = vadd.f32 %v1228, %v1241
        %1243 = vdwg.mxu0
        %v1244 = vld [vmem:[%s4] sm:$0x3]
        %v1246 = vperm.slane %v1244, 0
        %v1247 = vperm.slane %v1244, 1
        %v1250 = vmul.f32 %v1156, %v1246
        %v1251 = vmul.f32 %v1240, %v1247
        %v1252 = vmul.f32 %v1158, %v1246
        %v1253 = vmul.f32 %v1242, %v1247
        %v1254 = vld [vmem:[%s5] sm:$0x3]
        %v1256 = vperm.slane %v1254, 0
        %v1257 = vperm.slane %v1254, 1
        %v1260 = vadd.f32 %v1250, %v1256
        %v1261 = vadd.f32 %v1251, %v1257
        %v1262 = vadd.f32 %v1252, %v1256
        %v1263 = vadd.f32 %v1253, %v1257
        %vm1264 = vcmp.ge.f32.partialorder %v1260, 0.0
        %vm1265 = vcmp.ge.f32.partialorder %v1261, 0.0
        %vm1266 = vcmp.ge.f32.partialorder %v1262, 0.0
        %vm1267 = vcmp.ge.f32.partialorder %v1263, 0.0
        %v1268 = vmul.f32 %v1260, 0.01
        %v1269 = vmul.f32 %v1261, 0.01
        %v1270 = vmul.f32 %v1262, 0.01
        %v1271 = vmul.f32 %v1263, 0.01
        %v1272 = vsel %vm1264, %v1260, %v1268
        %v1273 = vsel %vm1265, %v1261, %v1269
        %v1274 = vsel %vm1266, %v1262, %v1270
        %v1275 = vsel %vm1267, %v1263, %v1271
        %v1276 = vrot.slane %v1272, 7
        %v1277 = vrot.slane %v1273, 7
        %v1278 = vrot.slane %v1274, 7
        %v1279 = vrot.slane %v1275, 7
        %v1280 = vsel %vm464, %v1276, %v1278
        %v1281 = vsel %vm464, %v1277, %v1279
        %v1282 = vsel %vm464, %v1278, %v1276
        %v1283 = vsel %vm464, %v1279, %v1277
        %v1284 = vsel %vm471, %v1282, 0.0
        %v1285 = vsel %vm471, %v1283, 0.0
        %v1286 = vsel %vm472, %v1280, 0.0
        %v1287 = vsel %vm472, %v1281, 0.0
        %v1288 = vrot.slane %v1272, 1
        %v1289 = vrot.slane %v1273, 1
        %v1290 = vrot.slane %v1274, 1
        %v1291 = vrot.slane %v1275, 1
        %v1292 = vsel %vm481, %v1288, %v1290
        %v1293 = vsel %vm481, %v1289, %v1291
        %v1294 = vsel %vm481, %v1290, %v1288
        %v1295 = vsel %vm481, %v1291, %v1289
        %v1296 = vsel %vm488, %v1292, 0.0
        %v1297 = vsel %vm488, %v1293, 0.0
        %v1298 = vsel %vm489, %v1294, 0.0
        %v1299 = vsel %vm489, %v1295, 0.0
        %v1300 = vpack.c.bf16 %v1286, %v1284
        %v1301 = vpack.c.bf16 %v1287, %v1285
        %v1302 = vpack.c.bf16 %v1274, %v1272
        %v1303 = vpack.c.bf16 %v1275, %v1273
        %v1304 = vpack.c.bf16 %v1298, %v1296
        %v1305 = vpack.c.bf16 %v1299, %v1297
        %v1306 = vpack.c.bf16 %v395, %v393
        %v1307 = vpack.c.bf16 %v396, %v394
        %v1308 = vld [vmem:[#allocation10] sm:$0xff]
        %v1309 = vld [vmem:[#allocation10 + $0x8] sm:$0xff]
        %v1310 = vld [vmem:[#allocation10 + $0x10] sm:$0xff]
        %v1311 = vld [vmem:[#allocation10 + $0x18] sm:$0xff]
        %v1312 = vld [vmem:[#allocation10 + $0x20] sm:$0xff]
        %v1313 = vld [vmem:[#allocation10 + $0x28] sm:$0xff]
        %v1314 = vld [vmem:[#allocation10 + $0x30] sm:$0xff]
        %v1315 = vld [vmem:[#allocation10 + $0x38] sm:$0xff]
        %v1316 = vld [vmem:[#allocation10 + $0x40] sm:$0xff]
        %v1317 = vld [vmem:[#allocation10 + $0x48] sm:$0xff]
        %v1318 = vld [vmem:[#allocation10 + $0x50] sm:$0xff]
        %v1319 = vld [vmem:[#allocation10 + $0x58] sm:$0xff]
        %v1320 = vld [vmem:[#allocation10 + $0x60] sm:$0xff]
        %v1321 = vld [vmem:[#allocation10 + $0x68] sm:$0xff]
        %v1322 = vld [vmem:[#allocation10 + $0x70] sm:$0xff]
        %v1323 = vld [vmem:[#allocation10 + $0x78] sm:$0xff]
        %v1324 = vld [vmem:[#allocation10 + $0x80] sm:$0xff]
        %v1325 = vld [vmem:[#allocation10 + $0x88] sm:$0xff]
        %v1326 = vld [vmem:[#allocation10 + $0x90] sm:$0xff]
        %v1327 = vld [vmem:[#allocation10 + $0x98] sm:$0xff]
        %v1328 = vld [vmem:[#allocation10 + $0xa0] sm:$0xff]
        %v1329 = vld [vmem:[#allocation10 + $0xa8] sm:$0xff]
        %v1330 = vld [vmem:[#allocation10 + $0xb0] sm:$0xff]
        %v1331 = vld [vmem:[#allocation10 + $0xb8] sm:$0xff]
        %v1332 = vld [vmem:[#allocation10 + $0xc0] sm:$0xff]
        %v1333 = vld [vmem:[#allocation10 + $0xc8] sm:$0xff]
        %v1334 = vld [vmem:[#allocation10 + $0xd0] sm:$0xff]
        %v1335 = vld [vmem:[#allocation10 + $0xd8] sm:$0xff]
        %v1336 = vld [vmem:[#allocation10 + $0xe0] sm:$0xff]
        %v1337 = vld [vmem:[#allocation10 + $0xe8] sm:$0xff]
        %v1338 = vld [vmem:[#allocation10 + $0xf0] sm:$0xff]
        %v1339 = vld [vmem:[#allocation10 + $0xf8] sm:$0xff]
        %v1340 = vld [vmem:[#allocation10 + $0x100] sm:$0xff]
        %v1341 = vld [vmem:[#allocation10 + $0x108] sm:$0xff]
        %v1342 = vld [vmem:[#allocation10 + $0x110] sm:$0xff]
        %v1343 = vld [vmem:[#allocation10 + $0x118] sm:$0xff]
        %v1344 = vld [vmem:[#allocation10 + $0x120] sm:$0xff]
        %v1345 = vld [vmem:[#allocation10 + $0x128] sm:$0xff]
        %v1346 = vld [vmem:[#allocation10 + $0x130] sm:$0xff]
        %v1347 = vld [vmem:[#allocation10 + $0x138] sm:$0xff]
        %v1348 = vld [vmem:[#allocation10 + $0x140] sm:$0xff]
        %v1349 = vld [vmem:[#allocation10 + $0x148] sm:$0xff]
        %v1350 = vld [vmem:[#allocation10 + $0x150] sm:$0xff]
        %v1351 = vld [vmem:[#allocation10 + $0x158] sm:$0xff]
        %v1352 = vld [vmem:[#allocation10 + $0x160] sm:$0xff]
        %v1353 = vld [vmem:[#allocation10 + $0x168] sm:$0xff]
        %v1354 = vld [vmem:[#allocation10 + $0x170] sm:$0xff]
        %v1355 = vld [vmem:[#allocation10 + $0x178] sm:$0xff]
        %v1356 = vld [vmem:[#allocation10 + $0x180] sm:$0xff]
        %v1357 = vld [vmem:[#allocation10 + $0x188] sm:$0xff]
        %v1358 = vld [vmem:[#allocation10 + $0x190] sm:$0xff]
        %v1359 = vld [vmem:[#allocation10 + $0x198] sm:$0xff]
        %v1360 = vld [vmem:[#allocation10 + $0x1a0] sm:$0xff]
        %v1361 = vld [vmem:[#allocation10 + $0x1a8] sm:$0xff]
        %v1362 = vld [vmem:[#allocation10 + $0x1b0] sm:$0xff]
        %v1363 = vld [vmem:[#allocation10 + $0x1b8] sm:$0xff]
        %v1364 = vld [vmem:[#allocation10 + $0x1c0] sm:$0xff]
        %v1365 = vld [vmem:[#allocation10 + $0x1c8] sm:$0xff]
        %v1366 = vld [vmem:[#allocation10 + $0x1d0] sm:$0xff]
        %v1367 = vld [vmem:[#allocation10 + $0x1d8] sm:$0xff]
        %v1368 = vld [vmem:[#allocation10 + $0x1e0] sm:$0xff]
        %v1369 = vld [vmem:[#allocation10 + $0x1e8] sm:$0xff]
        %v1370 = vld [vmem:[#allocation10 + $0x1f0] sm:$0xff]
        %v1371 = vld [vmem:[#allocation10 + $0x1f8] sm:$0xff]
        %v1372 = vld [vmem:[#allocation10 + $0x200] sm:$0xff]
        %v1373 = vld [vmem:[#allocation10 + $0x208] sm:$0xff]
        %v1374 = vld [vmem:[#allocation10 + $0x210] sm:$0xff]
        %v1375 = vld [vmem:[#allocation10 + $0x218] sm:$0xff]
        %v1376 = vld [vmem:[#allocation10 + $0x220] sm:$0xff]
        %v1377 = vld [vmem:[#allocation10 + $0x228] sm:$0xff]
        %v1378 = vld [vmem:[#allocation10 + $0x230] sm:$0xff]
        %v1379 = vld [vmem:[#allocation10 + $0x238] sm:$0xff]
        %v1380 = vld [vmem:[#allocation10 + $0x240] sm:$0xff]
        %v1381 = vld [vmem:[#allocation10 + $0x248] sm:$0xff]
        %v1382 = vld [vmem:[#allocation10 + $0x250] sm:$0xff]
        %v1383 = vld [vmem:[#allocation10 + $0x258] sm:$0xff]
        %v1384 = vld [vmem:[#allocation10 + $0x260] sm:$0xff]
        %v1385 = vld [vmem:[#allocation10 + $0x268] sm:$0xff]
        %v1386 = vld [vmem:[#allocation10 + $0x270] sm:$0xff]
        %v1387 = vld [vmem:[#allocation10 + $0x278] sm:$0xff]
        %v1388 = vld [vmem:[#allocation10 + $0x280] sm:$0xff]
        %v1389 = vld [vmem:[#allocation10 + $0x288] sm:$0xff]
        %v1390 = vld [vmem:[#allocation10 + $0x290] sm:$0xff]
        %v1391 = vld [vmem:[#allocation10 + $0x298] sm:$0xff]
        %v1392 = vld [vmem:[#allocation10 + $0x2a0] sm:$0xff]
        %v1393 = vld [vmem:[#allocation10 + $0x2a8] sm:$0xff]
        %v1394 = vld [vmem:[#allocation10 + $0x2b0] sm:$0xff]
        %v1395 = vld [vmem:[#allocation10 + $0x2b8] sm:$0xff]
        %v1396 = vld [vmem:[#allocation10 + $0x2c0] sm:$0xff]
        %v1397 = vld [vmem:[#allocation10 + $0x2c8] sm:$0xff]
        %v1398 = vld [vmem:[#allocation10 + $0x2d0] sm:$0xff]
        %v1399 = vld [vmem:[#allocation10 + $0x2d8] sm:$0xff]
        %v1400 = vld [vmem:[#allocation10 + $0x2e0] sm:$0xff]
        %v1401 = vld [vmem:[#allocation10 + $0x2e8] sm:$0xff]
        %v1402 = vld [vmem:[#allocation10 + $0x2f0] sm:$0xff]
        %v1403 = vld [vmem:[#allocation10 + $0x2f8] sm:$0xff]
        %v1404 = vld [vmem:[#allocation10 + $0x300] sm:$0xff]
        %v1405 = vld [vmem:[#allocation10 + $0x308] sm:$0xff]
        %v1406 = vld [vmem:[#allocation10 + $0x310] sm:$0xff]
        %v1407 = vld [vmem:[#allocation10 + $0x318] sm:$0xff]
        %v1408 = vld [vmem:[#allocation10 + $0x320] sm:$0xff]
        %v1409 = vld [vmem:[#allocation10 + $0x328] sm:$0xff]
        %v1410 = vld [vmem:[#allocation10 + $0x330] sm:$0xff]
        %v1411 = vld [vmem:[#allocation10 + $0x338] sm:$0xff]
        %v1412 = vld [vmem:[#allocation10 + $0x340] sm:$0xff]
        %v1413 = vld [vmem:[#allocation10 + $0x348] sm:$0xff]
        %v1414 = vld [vmem:[#allocation10 + $0x350] sm:$0xff]
        %v1415 = vld [vmem:[#allocation10 + $0x358] sm:$0xff]
        %v1416 = vld [vmem:[#allocation10 + $0x360] sm:$0xff]
        %v1417 = vld [vmem:[#allocation10 + $0x368] sm:$0xff]
        %v1418 = vld [vmem:[#allocation10 + $0x370] sm:$0xff]
        %v1419 = vld [vmem:[#allocation10 + $0x378] sm:$0xff]
        %v1420 = vld [vmem:[#allocation10 + $0x380] sm:$0xff]
        %v1421 = vld [vmem:[#allocation10 + $0x388] sm:$0xff]
        %v1422 = vld [vmem:[#allocation10 + $0x390] sm:$0xff]
        %v1423 = vld [vmem:[#allocation10 + $0x398] sm:$0xff]
        %v1424 = vld [vmem:[#allocation10 + $0x3a0] sm:$0xff]
        %v1425 = vld [vmem:[#allocation10 + $0x3a8] sm:$0xff]
        %v1426 = vld [vmem:[#allocation10 + $0x3b0] sm:$0xff]
        %v1427 = vld [vmem:[#allocation10 + $0x3b8] sm:$0xff]
        %v1428 = vld [vmem:[#allocation10 + $0x3c0] sm:$0xff]
        %v1429 = vld [vmem:[#allocation10 + $0x3c8] sm:$0xff]
        %v1430 = vld [vmem:[#allocation10 + $0x3d0] sm:$0xff]
        %v1431 = vld [vmem:[#allocation10 + $0x3d8] sm:$0xff]
        %v1432 = vld [vmem:[#allocation10 + $0x3e0] sm:$0xff]
        %v1433 = vld [vmem:[#allocation10 + $0x3e8] sm:$0xff]
        %v1434 = vld [vmem:[#allocation10 + $0x3f0] sm:$0xff]
        %v1435 = vld [vmem:[#allocation10 + $0x3f8] sm:$0xff]
        %v1436 = vld [vmem:[%s7] sm:$0x3]
        %v1438 = vperm.slane %v1436, 0
        %v1439 = vperm.slane %v1436, 1
        %v1570 = vunpack.c.l.b16 %v1308
        %v1571 = vunpack.c.h.b16 %v1308
        %v1572 = vunpack.c.l.b16 %v1309
        %v1573 = vunpack.c.h.b16 %v1309
        %v1574 = vunpack.c.l.b16 %v1310
        %v1575 = vunpack.c.h.b16 %v1310
        %v1576 = vunpack.c.l.b16 %v1311
        %v1577 = vunpack.c.h.b16 %v1311
        %v1578 = vunpack.c.l.b16 %v1312
        %v1579 = vunpack.c.h.b16 %v1312
        %v1580 = vunpack.c.l.b16 %v1313
        %v1581 = vunpack.c.h.b16 %v1313
        %v1582 = vunpack.c.l.b16 %v1314
        %v1583 = vunpack.c.h.b16 %v1314
        %v1584 = vunpack.c.l.b16 %v1315
        %v1585 = vunpack.c.h.b16 %v1315
        %v1586 = vunpack.c.l.b16 %v1316
        %v1587 = vunpack.c.h.b16 %v1316
        %v1588 = vunpack.c.l.b16 %v1317
        %v1589 = vunpack.c.h.b16 %v1317
        %v1590 = vunpack.c.l.b16 %v1318
        %v1591 = vunpack.c.h.b16 %v1318
        %v1592 = vunpack.c.l.b16 %v1319
        %v1593 = vunpack.c.h.b16 %v1319
        %v1594 = vunpack.c.l.b16 %v1320
        %v1595 = vunpack.c.h.b16 %v1320
        %v1596 = vunpack.c.l.b16 %v1321
        %v1597 = vunpack.c.h.b16 %v1321
        %v1598 = vunpack.c.l.b16 %v1322
        %v1599 = vunpack.c.h.b16 %v1322
        %v1600 = vunpack.c.l.b16 %v1323
        %v1601 = vunpack.c.h.b16 %v1323
        %v1602 = vunpack.c.l.b16 %v1324
        %v1603 = vunpack.c.h.b16 %v1324
        %v1604 = vunpack.c.l.b16 %v1325
        %v1605 = vunpack.c.h.b16 %v1325
        %v1606 = vunpack.c.l.b16 %v1326
        %v1607 = vunpack.c.h.b16 %v1326
        %v1608 = vunpack.c.l.b16 %v1327
        %v1609 = vunpack.c.h.b16 %v1327
        %v1610 = vunpack.c.l.b16 %v1328
        %v1611 = vunpack.c.h.b16 %v1328
        %v1612 = vunpack.c.l.b16 %v1329
        %v1613 = vunpack.c.h.b16 %v1329
        %v1614 = vunpack.c.l.b16 %v1330
        %v1615 = vunpack.c.h.b16 %v1330
        %v1616 = vunpack.c.l.b16 %v1331
        %v1617 = vunpack.c.h.b16 %v1331
        %v1618 = vunpack.c.l.b16 %v1332
        %v1619 = vunpack.c.h.b16 %v1332
        %v1620 = vunpack.c.l.b16 %v1333
        %v1621 = vunpack.c.h.b16 %v1333
        %v1622 = vunpack.c.l.b16 %v1334
        %v1623 = vunpack.c.h.b16 %v1334
        %v1624 = vunpack.c.l.b16 %v1335
        %v1625 = vunpack.c.h.b16 %v1335
        %v1626 = vunpack.c.l.b16 %v1336
        %v1627 = vunpack.c.h.b16 %v1336
        %v1628 = vunpack.c.l.b16 %v1337
        %v1629 = vunpack.c.h.b16 %v1337
        %v1630 = vunpack.c.l.b16 %v1338
        %v1631 = vunpack.c.h.b16 %v1338
        %v1632 = vunpack.c.l.b16 %v1339
        %v1633 = vunpack.c.h.b16 %v1339
        %v1634 = vunpack.c.l.b16 %v1340
        %v1635 = vunpack.c.h.b16 %v1340
        %v1636 = vunpack.c.l.b16 %v1341
        %v1637 = vunpack.c.h.b16 %v1341
        %v1638 = vunpack.c.l.b16 %v1342
        %v1639 = vunpack.c.h.b16 %v1342
        %v1640 = vunpack.c.l.b16 %v1343
        %v1641 = vunpack.c.h.b16 %v1343
        %v1642 = vunpack.c.l.b16 %v1344
        %v1643 = vunpack.c.h.b16 %v1344
        %v1644 = vunpack.c.l.b16 %v1345
        %v1645 = vunpack.c.h.b16 %v1345
        %v1646 = vunpack.c.l.b16 %v1346
        %v1647 = vunpack.c.h.b16 %v1346
        %v1648 = vunpack.c.l.b16 %v1347
        %v1649 = vunpack.c.h.b16 %v1347
        %v1650 = vunpack.c.l.b16 %v1348
        %v1651 = vunpack.c.h.b16 %v1348
        %v1652 = vunpack.c.l.b16 %v1349
        %v1653 = vunpack.c.h.b16 %v1349
        %v1654 = vunpack.c.l.b16 %v1350
        %v1655 = vunpack.c.h.b16 %v1350
        %v1656 = vunpack.c.l.b16 %v1351
        %v1657 = vunpack.c.h.b16 %v1351
        %v1658 = vunpack.c.l.b16 %v1352
        %v1659 = vunpack.c.h.b16 %v1352
        %v1660 = vunpack.c.l.b16 %v1353
        %v1661 = vunpack.c.h.b16 %v1353
        %v1662 = vunpack.c.l.b16 %v1354
        %v1663 = vunpack.c.h.b16 %v1354
        %v1664 = vunpack.c.l.b16 %v1355
        %v1665 = vunpack.c.h.b16 %v1355
        %v1666 = vunpack.c.l.b16 %v1356
        %v1667 = vunpack.c.h.b16 %v1356
        %v1668 = vunpack.c.l.b16 %v1357
        %v1669 = vunpack.c.h.b16 %v1357
        %v1670 = vunpack.c.l.b16 %v1358
        %v1671 = vunpack.c.h.b16 %v1358
        %v1672 = vunpack.c.l.b16 %v1359
        %v1673 = vunpack.c.h.b16 %v1359
        %v1674 = vunpack.c.l.b16 %v1360
        %v1675 = vunpack.c.h.b16 %v1360
        %v1676 = vunpack.c.l.b16 %v1361
        %v1677 = vunpack.c.h.b16 %v1361
        %v1678 = vunpack.c.l.b16 %v1362
        %v1679 = vunpack.c.h.b16 %v1362
        %v1680 = vunpack.c.l.b16 %v1363
        %v1681 = vunpack.c.h.b16 %v1363
        %v1682 = vunpack.c.l.b16 %v1364
        %v1683 = vunpack.c.h.b16 %v1364
        %v1684 = vunpack.c.l.b16 %v1365
        %v1685 = vunpack.c.h.b16 %v1365
        %v1686 = vunpack.c.l.b16 %v1366
        %v1687 = vunpack.c.h.b16 %v1366
        %v1688 = vunpack.c.l.b16 %v1367
        %v1689 = vunpack.c.h.b16 %v1367
        %v1690 = vunpack.c.l.b16 %v1368
        %v1691 = vunpack.c.h.b16 %v1368
        %v1692 = vunpack.c.l.b16 %v1369
        %v1693 = vunpack.c.h.b16 %v1369
        %v1694 = vunpack.c.l.b16 %v1370
        %v1695 = vunpack.c.h.b16 %v1370
        %v1696 = vunpack.c.l.b16 %v1371
        %v1697 = vunpack.c.h.b16 %v1371
        %v1698 = vunpack.c.l.b16 %v1372
        %v1699 = vunpack.c.h.b16 %v1372
        %v1700 = vunpack.c.l.b16 %v1373
        %v1701 = vunpack.c.h.b16 %v1373
        %v1702 = vunpack.c.l.b16 %v1374
        %v1703 = vunpack.c.h.b16 %v1374
        %v1704 = vunpack.c.l.b16 %v1375
        %v1705 = vunpack.c.h.b16 %v1375
        %v1706 = vunpack.c.l.b16 %v1376
        %v1707 = vunpack.c.h.b16 %v1376
        %v1708 = vunpack.c.l.b16 %v1377
        %v1709 = vunpack.c.h.b16 %v1377
        %v1710 = vunpack.c.l.b16 %v1378
        %v1711 = vunpack.c.h.b16 %v1378
        %v1712 = vunpack.c.l.b16 %v1379
        %v1713 = vunpack.c.h.b16 %v1379
        %v1714 = vunpack.c.l.b16 %v1380
        %v1715 = vunpack.c.h.b16 %v1380
        %v1716 = vunpack.c.l.b16 %v1381
        %v1717 = vunpack.c.h.b16 %v1381
        %v1718 = vunpack.c.l.b16 %v1382
        %v1719 = vunpack.c.h.b16 %v1382
        %v1720 = vunpack.c.l.b16 %v1383
        %v1721 = vunpack.c.h.b16 %v1383
        %v1722 = vunpack.c.l.b16 %v1384
        %v1723 = vunpack.c.h.b16 %v1384
        %v1724 = vunpack.c.l.b16 %v1385
        %v1725 = vunpack.c.h.b16 %v1385
        %v1726 = vunpack.c.l.b16 %v1386
        %v1727 = vunpack.c.h.b16 %v1386
        %v1728 = vunpack.c.l.b16 %v1387
        %v1729 = vunpack.c.h.b16 %v1387
        %v1730 = vunpack.c.l.b16 %v1388
        %v1731 = vunpack.c.h.b16 %v1388
        %v1732 = vunpack.c.l.b16 %v1389
        %v1733 = vunpack.c.h.b16 %v1389
        %v1734 = vunpack.c.l.b16 %v1390
        %v1735 = vunpack.c.h.b16 %v1390
        %v1736 = vunpack.c.l.b16 %v1391
        %v1737 = vunpack.c.h.b16 %v1391
        %v1738 = vunpack.c.l.b16 %v1392
        %v1739 = vunpack.c.h.b16 %v1392
        %v1740 = vunpack.c.l.b16 %v1393
        %v1741 = vunpack.c.h.b16 %v1393
        %v1742 = vunpack.c.l.b16 %v1394
        %v1743 = vunpack.c.h.b16 %v1394
        %v1744 = vunpack.c.l.b16 %v1395
        %v1745 = vunpack.c.h.b16 %v1395
        %v1746 = vunpack.c.l.b16 %v1396
        %v1747 = vunpack.c.h.b16 %v1396
        %v1748 = vunpack.c.l.b16 %v1397
        %v1749 = vunpack.c.h.b16 %v1397
        %v1750 = vunpack.c.l.b16 %v1398
        %v1751 = vunpack.c.h.b16 %v1398
        %v1752 = vunpack.c.l.b16 %v1399
        %v1753 = vunpack.c.h.b16 %v1399
        %v1754 = vunpack.c.l.b16 %v1400
        %v1755 = vunpack.c.h.b16 %v1400
        %v1756 = vunpack.c.l.b16 %v1401
        %v1757 = vunpack.c.h.b16 %v1401
        %v1758 = vunpack.c.l.b16 %v1402
        %v1759 = vunpack.c.h.b16 %v1402
        %v1760 = vunpack.c.l.b16 %v1403
        %v1761 = vunpack.c.h.b16 %v1403
        %v1762 = vunpack.c.l.b16 %v1404
        %v1763 = vunpack.c.h.b16 %v1404
        %v1764 = vunpack.c.l.b16 %v1405
        %v1765 = vunpack.c.h.b16 %v1405
        %v1766 = vunpack.c.l.b16 %v1406
        %v1767 = vunpack.c.h.b16 %v1406
        %v1768 = vunpack.c.l.b16 %v1407
        %v1769 = vunpack.c.h.b16 %v1407
        %v1770 = vunpack.c.l.b16 %v1408
        %v1771 = vunpack.c.h.b16 %v1408
        %v1772 = vunpack.c.l.b16 %v1409
        %v1773 = vunpack.c.h.b16 %v1409
        %v1774 = vunpack.c.l.b16 %v1410
        %v1775 = vunpack.c.h.b16 %v1410
        %v1776 = vunpack.c.l.b16 %v1411
        %v1777 = vunpack.c.h.b16 %v1411
        %v1778 = vunpack.c.l.b16 %v1412
        %v1779 = vunpack.c.h.b16 %v1412
        %v1780 = vunpack.c.l.b16 %v1413
        %v1781 = vunpack.c.h.b16 %v1413
        %v1782 = vunpack.c.l.b16 %v1414
        %v1783 = vunpack.c.h.b16 %v1414
        %v1784 = vunpack.c.l.b16 %v1415
        %v1785 = vunpack.c.h.b16 %v1415
        %v1786 = vunpack.c.l.b16 %v1416
        %v1787 = vunpack.c.h.b16 %v1416
        %v1788 = vunpack.c.l.b16 %v1417
        %v1789 = vunpack.c.h.b16 %v1417
        %v1790 = vunpack.c.l.b16 %v1418
        %v1791 = vunpack.c.h.b16 %v1418
        %v1792 = vunpack.c.l.b16 %v1419
        %v1793 = vunpack.c.h.b16 %v1419
        %v1794 = vunpack.c.l.b16 %v1420
        %v1795 = vunpack.c.h.b16 %v1420
        %v1796 = vunpack.c.l.b16 %v1421
        %v1797 = vunpack.c.h.b16 %v1421
        %v1798 = vunpack.c.l.b16 %v1422
        %v1799 = vunpack.c.h.b16 %v1422
        %v1800 = vunpack.c.l.b16 %v1423
        %v1801 = vunpack.c.h.b16 %v1423
        %v1802 = vunpack.c.l.b16 %v1424
        %v1803 = vunpack.c.h.b16 %v1424
        %v1804 = vunpack.c.l.b16 %v1425
        %v1805 = vunpack.c.h.b16 %v1425
        %v1806 = vunpack.c.l.b16 %v1426
        %v1807 = vunpack.c.h.b16 %v1426
        %v1808 = vunpack.c.l.b16 %v1427
        %v1809 = vunpack.c.h.b16 %v1427
        %v1810 = vunpack.c.l.b16 %v1428
        %v1811 = vunpack.c.h.b16 %v1428
        %v1812 = vunpack.c.l.b16 %v1429
        %v1813 = vunpack.c.h.b16 %v1429
        %v1814 = vunpack.c.l.b16 %v1430
        %v1815 = vunpack.c.h.b16 %v1430
        %v1816 = vunpack.c.l.b16 %v1431
        %v1817 = vunpack.c.h.b16 %v1431
        %v1818 = vunpack.c.l.b16 %v1432
        %v1819 = vunpack.c.h.b16 %v1432
        %v1820 = vunpack.c.l.b16 %v1433
        %v1821 = vunpack.c.h.b16 %v1433
        %v1822 = vunpack.c.l.b16 %v1434
        %v1823 = vunpack.c.h.b16 %v1434
        %v1824 = vunpack.c.l.b16 %v1435
        %v1825 = vunpack.c.h.b16 %v1435
        %v1826 = vpack.c.b16 %v1572, %v1570
        %v1827 = vpack.c.b16 %v1573, %v1571
        %v1828 = vpack.c.b16 %v1576, %v1574
        %v1829 = vpack.c.b16 %v1577, %v1575
        %v1830 = vpack.c.b16 %v1580, %v1578
        %v1831 = vpack.c.b16 %v1581, %v1579
        %v1832 = vpack.c.b16 %v1584, %v1582
        %v1833 = vpack.c.b16 %v1585, %v1583
        %v1834 = vpack.c.b16 %v1588, %v1586
        %v1835 = vpack.c.b16 %v1589, %v1587
        %v1836 = vpack.c.b16 %v1592, %v1590
        %v1837 = vpack.c.b16 %v1593, %v1591
        %v1838 = vpack.c.b16 %v1596, %v1594
        %v1839 = vpack.c.b16 %v1597, %v1595
        %v1840 = vpack.c.b16 %v1600, %v1598
        %v1841 = vpack.c.b16 %v1601, %v1599
        %v1842 = vpack.c.b16 %v1604, %v1602
        %v1843 = vpack.c.b16 %v1605, %v1603
        %v1844 = vpack.c.b16 %v1608, %v1606
        %v1845 = vpack.c.b16 %v1609, %v1607
        %v1846 = vpack.c.b16 %v1612, %v1610
        %v1847 = vpack.c.b16 %v1613, %v1611
        %v1848 = vpack.c.b16 %v1616, %v1614
        %v1849 = vpack.c.b16 %v1617, %v1615
        %v1850 = vpack.c.b16 %v1620, %v1618
        %v1851 = vpack.c.b16 %v1621, %v1619
        %v1852 = vpack.c.b16 %v1624, %v1622
        %v1853 = vpack.c.b16 %v1625, %v1623
        %v1854 = vpack.c.b16 %v1628, %v1626
        %v1855 = vpack.c.b16 %v1629, %v1627
        %v1856 = vpack.c.b16 %v1632, %v1630
        %v1857 = vpack.c.b16 %v1633, %v1631
        %v1858 = vpack.c.b16 %v1636, %v1634
        %v1859 = vpack.c.b16 %v1637, %v1635
        %v1860 = vpack.c.b16 %v1640, %v1638
        %v1861 = vpack.c.b16 %v1641, %v1639
        %v1862 = vpack.c.b16 %v1644, %v1642
        %v1863 = vpack.c.b16 %v1645, %v1643
        %v1864 = vpack.c.b16 %v1648, %v1646
        %v1865 = vpack.c.b16 %v1649, %v1647
        %v1866 = vpack.c.b16 %v1652, %v1650
        %v1867 = vpack.c.b16 %v1653, %v1651
        %v1868 = vpack.c.b16 %v1656, %v1654
        %v1869 = vpack.c.b16 %v1657, %v1655
        %v1870 = vpack.c.b16 %v1660, %v1658
        %v1871 = vpack.c.b16 %v1661, %v1659
        %v1872 = vpack.c.b16 %v1664, %v1662
        %v1873 = vpack.c.b16 %v1665, %v1663
        %v1874 = vpack.c.b16 %v1668, %v1666
        %v1875 = vpack.c.b16 %v1669, %v1667
        %v1876 = vpack.c.b16 %v1672, %v1670
        %v1877 = vpack.c.b16 %v1673, %v1671
        %v1878 = vpack.c.b16 %v1676, %v1674
        %v1879 = vpack.c.b16 %v1677, %v1675
        %v1880 = vpack.c.b16 %v1680, %v1678
        %v1881 = vpack.c.b16 %v1681, %v1679
        %v1882 = vpack.c.b16 %v1684, %v1682
        %v1883 = vpack.c.b16 %v1685, %v1683
        %v1884 = vpack.c.b16 %v1688, %v1686
        %v1885 = vpack.c.b16 %v1689, %v1687
        %v1886 = vpack.c.b16 %v1692, %v1690
        %v1887 = vpack.c.b16 %v1693, %v1691
        %v1888 = vpack.c.b16 %v1696, %v1694
        %v1889 = vpack.c.b16 %v1697, %v1695
        %v1890 = vpack.c.b16 %v1700, %v1698
        %v1891 = vpack.c.b16 %v1701, %v1699
        %v1892 = vpack.c.b16 %v1704, %v1702
        %v1893 = vpack.c.b16 %v1705, %v1703
        %v1894 = vpack.c.b16 %v1708, %v1706
        %v1895 = vpack.c.b16 %v1709, %v1707
        %v1896 = vpack.c.b16 %v1712, %v1710
        %v1897 = vpack.c.b16 %v1713, %v1711
        %v1898 = vpack.c.b16 %v1716, %v1714
        %v1899 = vpack.c.b16 %v1717, %v1715
        %v1900 = vpack.c.b16 %v1720, %v1718
        %v1901 = vpack.c.b16 %v1721, %v1719
        %v1902 = vpack.c.b16 %v1724, %v1722
        %v1903 = vpack.c.b16 %v1725, %v1723
        %v1904 = vpack.c.b16 %v1728, %v1726
        %v1905 = vpack.c.b16 %v1729, %v1727
        %v1906 = vpack.c.b16 %v1732, %v1730
        %v1907 = vpack.c.b16 %v1733, %v1731
        %v1908 = vpack.c.b16 %v1736, %v1734
        %v1909 = vpack.c.b16 %v1737, %v1735
        %v1910 = vpack.c.b16 %v1740, %v1738
        %v1911 = vpack.c.b16 %v1741, %v1739
        %v1912 = vpack.c.b16 %v1744, %v1742
        %v1913 = vpack.c.b16 %v1745, %v1743
        %v1914 = vpack.c.b16 %v1748, %v1746
        %v1915 = vpack.c.b16 %v1749, %v1747
        %v1916 = vpack.c.b16 %v1752, %v1750
        %v1917 = vpack.c.b16 %v1753, %v1751
        %v1918 = vpack.c.b16 %v1756, %v1754
        %v1919 = vpack.c.b16 %v1757, %v1755
        %v1920 = vpack.c.b16 %v1760, %v1758
        %v1921 = vpack.c.b16 %v1761, %v1759
        %v1922 = vpack.c.b16 %v1764, %v1762
        %v1923 = vpack.c.b16 %v1765, %v1763
        %v1924 = vpack.c.b16 %v1768, %v1766
        %v1925 = vpack.c.b16 %v1769, %v1767
        %v1926 = vpack.c.b16 %v1772, %v1770
        %v1927 = vpack.c.b16 %v1773, %v1771
        %v1928 = vpack.c.b16 %v1776, %v1774
        %v1929 = vpack.c.b16 %v1777, %v1775
        %v1930 = vpack.c.b16 %v1780, %v1778
        %v1931 = vpack.c.b16 %v1781, %v1779
        %v1932 = vpack.c.b16 %v1784, %v1782
        %v1933 = vpack.c.b16 %v1785, %v1783
        %v1934 = vpack.c.b16 %v1788, %v1786
        %v1935 = vpack.c.b16 %v1789, %v1787
        %v1936 = vpack.c.b16 %v1792, %v1790
        %v1937 = vpack.c.b16 %v1793, %v1791
        %v1938 = vpack.c.b16 %v1796, %v1794
        %v1939 = vpack.c.b16 %v1797, %v1795
        %v1940 = vpack.c.b16 %v1800, %v1798
        %v1941 = vpack.c.b16 %v1801, %v1799
        %v1942 = vpack.c.b16 %v1804, %v1802
        %v1943 = vpack.c.b16 %v1805, %v1803
        %v1944 = vpack.c.b16 %v1808, %v1806
        %v1945 = vpack.c.b16 %v1809, %v1807
        %v1946 = vpack.c.b16 %v1812, %v1810
        %v1947 = vpack.c.b16 %v1813, %v1811
        %v1948 = vpack.c.b16 %v1816, %v1814
        %v1949 = vpack.c.b16 %v1817, %v1815
        %v1950 = vpack.c.b16 %v1820, %v1818
        %v1951 = vpack.c.b16 %v1821, %v1819
        %v1952 = vpack.c.b16 %v1824, %v1822
        %v1953 = vpack.c.b16 %v1825, %v1823
        %2082 = vmatpush.bf16.msra.mxu0 %v1840
        %2083 = vmatpush.bf16.msra.mxu0 %v1838
        %2084 = vmatpush.bf16.msra.mxu0 %v1836
        %2085 = vmatpush.bf16.msra.mxu0 %v1834
        %2086 = vmatpush.bf16.msra.mxu0 %v1832
        %2087 = vmatpush.bf16.msra.mxu0 %v1830
        %2088 = vmatpush.bf16.msra.mxu0 %v1828
        %2089 = vmatpush.bf16.msra.mxu0 %v1826
        %2090 = vmatmul.bf16.gmra.mxu0 %v1300
        %v2091 = vpop.f32.mrf.mxu0
        %v2092 = vadd.f32 %v1438, %v2091
        %v2093 = vpop.f32.mrf.mxu0
        %v2094 = vadd.f32 %v1438, %v2093
        %2095 = vdwg.mxu0
        %2096 = vmatpush.bf16.msra.mxu0 %v1856
        %2097 = vmatpush.bf16.msra.mxu0 %v1854
        %2098 = vmatpush.bf16.msra.mxu0 %v1852
        %2099 = vmatpush.bf16.msra.mxu0 %v1850
        %2100 = vmatpush.bf16.msra.mxu0 %v1848
        %2101 = vmatpush.bf16.msra.mxu0 %v1846
        %2102 = vmatpush.bf16.msra.mxu0 %v1844
        %2103 = vmatpush.bf16.msra.mxu0 %v1842
        %2104 = vmatmul.bf16.gmra.mxu0 %v1301
        %v2105 = vpop.f32.mrf.mxu0
        %v2106 = vadd.f32 %v2092, %v2105
        %v2107 = vpop.f32.mrf.mxu0
        %v2108 = vadd.f32 %v2094, %v2107
        %2109 = vdwg.mxu0
        %2110 = vmatpush.bf16.msra.mxu0 %v1872
        %2111 = vmatpush.bf16.msra.mxu0 %v1870
        %2112 = vmatpush.bf16.msra.mxu0 %v1868
        %2113 = vmatpush.bf16.msra.mxu0 %v1866
        %2114 = vmatpush.bf16.msra.mxu0 %v1864
        %2115 = vmatpush.bf16.msra.mxu0 %v1862
        %2116 = vmatpush.bf16.msra.mxu0 %v1860
        %2117 = vmatpush.bf16.msra.mxu0 %v1858
        %2118 = vmatmul.bf16.gmra.mxu0 %v1302
        %v2119 = vpop.f32.mrf.mxu0
        %v2120 = vadd.f32 %v2106, %v2119
        %v2121 = vpop.f32.mrf.mxu0
        %v2122 = vadd.f32 %v2108, %v2121
        %2123 = vdwg.mxu0
        %2124 = vmatpush.bf16.msra.mxu0 %v1888
        %2125 = vmatpush.bf16.msra.mxu0 %v1886
        %2126 = vmatpush.bf16.msra.mxu0 %v1884
        %2127 = vmatpush.bf16.msra.mxu0 %v1882
        %2128 = vmatpush.bf16.msra.mxu0 %v1880
        %2129 = vmatpush.bf16.msra.mxu0 %v1878
        %2130 = vmatpush.bf16.msra.mxu0 %v1876
        %2131 = vmatpush.bf16.msra.mxu0 %v1874
        %2132 = vmatmul.bf16.gmra.mxu0 %v1303
        %v2133 = vpop.f32.mrf.mxu0
        %v2134 = vadd.f32 %v2120, %v2133
        %v2135 = vpop.f32.mrf.mxu0
        %v2136 = vadd.f32 %v2122, %v2135
        %2137 = vdwg.mxu0
        %2138 = vmatpush.bf16.msra.mxu0 %v1904
        %2139 = vmatpush.bf16.msra.mxu0 %v1902
        %2140 = vmatpush.bf16.msra.mxu0 %v1900
        %2141 = vmatpush.bf16.msra.mxu0 %v1898
        %2142 = vmatpush.bf16.msra.mxu0 %v1896
        %2143 = vmatpush.bf16.msra.mxu0 %v1894
        %2144 = vmatpush.bf16.msra.mxu0 %v1892
        %2145 = vmatpush.bf16.msra.mxu0 %v1890
        %2146 = vmatmul.bf16.gmra.mxu0 %v1304
        %v2147 = vpop.f32.mrf.mxu0
        %v2148 = vadd.f32 %v2134, %v2147
        %v2149 = vpop.f32.mrf.mxu0
        %v2150 = vadd.f32 %v2136, %v2149
        %2151 = vdwg.mxu0
        %2152 = vmatpush.bf16.msra.mxu0 %v1920
        %2153 = vmatpush.bf16.msra.mxu0 %v1918
        %2154 = vmatpush.bf16.msra.mxu0 %v1916
        %2155 = vmatpush.bf16.msra.mxu0 %v1914
        %2156 = vmatpush.bf16.msra.mxu0 %v1912
        %2157 = vmatpush.bf16.msra.mxu0 %v1910
        %2158 = vmatpush.bf16.msra.mxu0 %v1908
        %2159 = vmatpush.bf16.msra.mxu0 %v1906
        %2160 = vmatmul.bf16.gmra.mxu0 %v1305
        %v2161 = vpop.f32.mrf.mxu0
        %v2162 = vadd.f32 %v2148, %v2161
        %v2163 = vpop.f32.mrf.mxu0
        %v2164 = vadd.f32 %v2150, %v2163
        %2165 = vdwg.mxu0
        %2166 = vmatpush.bf16.msra.mxu0 %v1936
        %2167 = vmatpush.bf16.msra.mxu0 %v1934
        %2168 = vmatpush.bf16.msra.mxu0 %v1932
        %2169 = vmatpush.bf16.msra.mxu0 %v1930
        %2170 = vmatpush.bf16.msra.mxu0 %v1928
        %2171 = vmatpush.bf16.msra.mxu0 %v1926
        %2172 = vmatpush.bf16.msra.mxu0 %v1924
        %2173 = vmatpush.bf16.msra.mxu0 %v1922
        %2174 = vmatmul.bf16.gmra.mxu0 %v1306
        %v2175 = vpop.f32.mrf.mxu0
        %v2176 = vadd.f32 %v2162, %v2175
        %v2177 = vpop.f32.mrf.mxu0
        %v2178 = vadd.f32 %v2164, %v2177
        %2179 = vdwg.mxu0
        %2180 = vmatpush.bf16.msra.mxu0 %v1952
        %2181 = vmatpush.bf16.msra.mxu0 %v1950
        %2182 = vmatpush.bf16.msra.mxu0 %v1948
        %2183 = vmatpush.bf16.msra.mxu0 %v1946
        %2184 = vmatpush.bf16.msra.mxu0 %v1944
        %2185 = vmatpush.bf16.msra.mxu0 %v1942
        %2186 = vmatpush.bf16.msra.mxu0 %v1940
        %2187 = vmatpush.bf16.msra.mxu0 %v1938
        %2188 = vmatmul.bf16.gmra.mxu0 %v1307
        %v2189 = vpop.f32.mrf.mxu0
        %v2190 = vadd.f32 %v2176, %v2189
        %v2191 = vpop.f32.mrf.mxu0
        %v2192 = vadd.f32 %v2178, %v2191
        %2193 = vdwg.mxu0
        %2194 = vmatpush.bf16.msra.mxu0 %v1841
        %2195 = vmatpush.bf16.msra.mxu0 %v1839
        %2196 = vmatpush.bf16.msra.mxu0 %v1837
        %2197 = vmatpush.bf16.msra.mxu0 %v1835
        %2198 = vmatpush.bf16.msra.mxu0 %v1833
        %2199 = vmatpush.bf16.msra.mxu0 %v1831
        %2200 = vmatpush.bf16.msra.mxu0 %v1829
        %2201 = vmatpush.bf16.msra.mxu0 %v1827
        %2202 = vmatmul.bf16.gmra.mxu0 %v1300
        %v2203 = vpop.f32.mrf.mxu0
        %v2204 = vadd.f32 %v1439, %v2203
        %v2205 = vpop.f32.mrf.mxu0
        %v2206 = vadd.f32 %v1439, %v2205
        %2207 = vdwg.mxu0
        %2208 = vmatpush.bf16.msra.mxu0 %v1857
        %2209 = vmatpush.bf16.msra.mxu0 %v1855
        %2210 = vmatpush.bf16.msra.mxu0 %v1853
        %2211 = vmatpush.bf16.msra.mxu0 %v1851
        %2212 = vmatpush.bf16.msra.mxu0 %v1849
        %2213 = vmatpush.bf16.msra.mxu0 %v1847
        %2214 = vmatpush.bf16.msra.mxu0 %v1845
        %2215 = vmatpush.bf16.msra.mxu0 %v1843
        %2216 = vmatmul.bf16.gmra.mxu0 %v1301
        %v2217 = vpop.f32.mrf.mxu0
        %v2218 = vadd.f32 %v2204, %v2217
        %v2219 = vpop.f32.mrf.mxu0
        %v2220 = vadd.f32 %v2206, %v2219
        %2221 = vdwg.mxu0
        %2222 = vmatpush.bf16.msra.mxu0 %v1873
        %2223 = vmatpush.bf16.msra.mxu0 %v1871
        %2224 = vmatpush.bf16.msra.mxu0 %v1869
        %2225 = vmatpush.bf16.msra.mxu0 %v1867
        %2226 = vmatpush.bf16.msra.mxu0 %v1865
        %2227 = vmatpush.bf16.msra.mxu0 %v1863
        %2228 = vmatpush.bf16.msra.mxu0 %v1861
        %2229 = vmatpush.bf16.msra.mxu0 %v1859
        %2230 = vmatmul.bf16.gmra.mxu0 %v1302
        %v2231 = vpop.f32.mrf.mxu0
        %v2232 = vadd.f32 %v2218, %v2231
        %v2233 = vpop.f32.mrf.mxu0
        %v2234 = vadd.f32 %v2220, %v2233
        %2235 = vdwg.mxu0
        %2236 = vmatpush.bf16.msra.mxu0 %v1889
        %2237 = vmatpush.bf16.msra.mxu0 %v1887
        %2238 = vmatpush.bf16.msra.mxu0 %v1885
        %2239 = vmatpush.bf16.msra.mxu0 %v1883
        %2240 = vmatpush.bf16.msra.mxu0 %v1881
        %2241 = vmatpush.bf16.msra.mxu0 %v1879
        %2242 = vmatpush.bf16.msra.mxu0 %v1877
        %2243 = vmatpush.bf16.msra.mxu0 %v1875
        %2244 = vmatmul.bf16.gmra.mxu0 %v1303
        %v2245 = vpop.f32.mrf.mxu0
        %v2246 = vadd.f32 %v2232, %v2245
        %v2247 = vpop.f32.mrf.mxu0
        %v2248 = vadd.f32 %v2234, %v2247
        %2249 = vdwg.mxu0
        %2250 = vmatpush.bf16.msra.mxu0 %v1905
        %2251 = vmatpush.bf16.msra.mxu0 %v1903
        %2252 = vmatpush.bf16.msra.mxu0 %v1901
        %2253 = vmatpush.bf16.msra.mxu0 %v1899
        %2254 = vmatpush.bf16.msra.mxu0 %v1897
        %2255 = vmatpush.bf16.msra.mxu0 %v1895
        %2256 = vmatpush.bf16.msra.mxu0 %v1893
        %2257 = vmatpush.bf16.msra.mxu0 %v1891
        %2258 = vmatmul.bf16.gmra.mxu0 %v1304
        %v2259 = vpop.f32.mrf.mxu0
        %v2260 = vadd.f32 %v2246, %v2259
        %v2261 = vpop.f32.mrf.mxu0
        %v2262 = vadd.f32 %v2248, %v2261
        %2263 = vdwg.mxu0
        %2264 = vmatpush.bf16.msra.mxu0 %v1921
        %2265 = vmatpush.bf16.msra.mxu0 %v1919
        %2266 = vmatpush.bf16.msra.mxu0 %v1917
        %2267 = vmatpush.bf16.msra.mxu0 %v1915
        %2268 = vmatpush.bf16.msra.mxu0 %v1913
        %2269 = vmatpush.bf16.msra.mxu0 %v1911
        %2270 = vmatpush.bf16.msra.mxu0 %v1909
        %2271 = vmatpush.bf16.msra.mxu0 %v1907
        %2272 = vmatmul.bf16.gmra.mxu0 %v1305
        %v2273 = vpop.f32.mrf.mxu0
        %v2274 = vadd.f32 %v2260, %v2273
        %v2275 = vpop.f32.mrf.mxu0
        %v2276 = vadd.f32 %v2262, %v2275
        %2277 = vdwg.mxu0
        %2278 = vmatpush.bf16.msra.mxu0 %v1937
        %2279 = vmatpush.bf16.msra.mxu0 %v1935
        %2280 = vmatpush.bf16.msra.mxu0 %v1933
        %2281 = vmatpush.bf16.msra.mxu0 %v1931
        %2282 = vmatpush.bf16.msra.mxu0 %v1929
        %2283 = vmatpush.bf16.msra.mxu0 %v1927
        %2284 = vmatpush.bf16.msra.mxu0 %v1925
        %2285 = vmatpush.bf16.msra.mxu0 %v1923
        %2286 = vmatmul.bf16.gmra.mxu0 %v1306
        %v2287 = vpop.f32.mrf.mxu0
        %v2288 = vadd.f32 %v2274, %v2287
        %v2289 = vpop.f32.mrf.mxu0
        %v2290 = vadd.f32 %v2276, %v2289
        %2291 = vdwg.mxu0
        %2292 = vmatpush.bf16.msra.mxu0 %v1953
        %2293 = vmatpush.bf16.msra.mxu0 %v1951
        %2294 = vmatpush.bf16.msra.mxu0 %v1949
        %2295 = vmatpush.bf16.msra.mxu0 %v1947
        %2296 = vmatpush.bf16.msra.mxu0 %v1945
        %2297 = vmatpush.bf16.msra.mxu0 %v1943
        %2298 = vmatpush.bf16.msra.mxu0 %v1941
        %2299 = vmatpush.bf16.msra.mxu0 %v1939
        %2300 = vmatmul.bf16.gmra.mxu0 %v1307
        %v2301 = vpop.f32.mrf.mxu0
        %v2302 = vadd.f32 %v2288, %v2301
        %v2303 = vpop.f32.mrf.mxu0
        %v2304 = vadd.f32 %v2290, %v2303
        %2305 = vdwg.mxu0
        %2306 = vst [vmem:[%s388] sm:$0xff] %v2190
        %2307 = vst [vmem:[%s388 + $0x8] sm:$0xff] %v2302
        %2308 = vst [vmem:[%s388 + $0x10] sm:$0xff] %v2192
        %2309 = vst [vmem:[%s388 + $0x18] sm:$0xff] %v2304
        %s2310 = sand.u32 %s208, 1
        %s2311 = scalar_lea.sflag [#allocation4], %s2310
        %s2312 = sand.u32 %s208, 1
        %s2313 = smul.addr %s2312, 32
        %s2314 = scalar_lea.vmem [#allocation11], %s2313
        // Predicated region
        $region73: #{tpu_custom_call.1} parent=51 // pred_check
          %p2315 = pneg %p218
        $region74: #{tpu_custom_call.1} parent=51 // pred_check_branch
          %2317 = sbr.rel (%p2315) target = $region76
        $region75: #{tpu_custom_call.1} parent=51 // pred_region
          %s2318 = smul.u32 2, %s27
          %2320 = vsyncadd %s2311, 0
          %s2321 = smul.addr %s2318, 2
          %s2322 = smul.addr %s2321, 8
          %s2323 = scalar_lea.hbm %s8, %s2322
          %s2324 = sshll.u32 %s2314, 4
          %s2325 = int_to_ptr.vmem [resolvable:$true] %s2324
          %s2326 = sshll.u32 %s2323, 4
          %s2327 = int_to_ptr.hbm [resolvable:$true] %s2326
          %2332 = dma.vmem_to_hbm [thread:$0]  %s2325, 512, %s2327, %s2311, 256, 256, 16
        $region76: #{tpu_custom_call.1} parent=51 // pred_fallthru
          _
      $region52: #{tpu_custom_call.1} parent=5 // pred_fallthru
        _
      %p2333 = scmp.le.s32.totalorder 2, %s22
      // Predicated region
      $region77: #{tpu_custom_call.1} parent=5 // pred_check
        %p2334 = pneg %p2333
      $region78: #{tpu_custom_call.1} parent=5 // pred_check_branch
        %2336 = sbr.rel (%p2334) target = $region80
      $region79: #{tpu_custom_call.1} parent=5 // pred_region
        %s2337 = ssub.s32 %s22, 2
        // Predicated region
        $region81: #{tpu_custom_call.1} parent=79 // pred_check
          %p2338 = pneg %p224
        $region82: #{tpu_custom_call.1} parent=79 // pred_check_branch
          %2340 = sbr.rel (%p2338) target = $region84
        $region83: #{tpu_custom_call.1} parent=79 // pred_region
          %s2341 = sand.u32 %s209, 1
          %s2342 = scalar_lea.sflag [#allocation4], %s2341
          %s2343 = sand.u32 %s209, 1
          %s2344 = smul.addr %s2343, 32
          %s2345 = scalar_lea.vmem [#allocation11], %s2344
          %2347 = dma.done %s2342, 512
        $region84: #{tpu_custom_call.1} parent=79 // pred_fallthru
          _
      $region80: #{tpu_custom_call.1} parent=5 // pred_fallthru
        _
    $region6: #{tpu_custom_call.1} parent=1 // loop_footer
      %s26 = sadd.s32 1, %s22
    $region7: #{tpu_custom_call.1} parent=1 // loop_footer_branch
      %21 = sbr.rel target = $region3
    $region8: #{tpu_custom_call.1} parent=1 // loop_exit
      _
    %2348 = vsyncpa [#allocation3], 1
    %s2349 = scalar_lea.sflag [#allocation3], 1
    %2350 = vsyncpa %s2349, 1
    %2351 = vsyncpa [#allocation6], 1
    %2352 = vsyncpa [#allocation9], 1
    %2353 = vsyncpa [#allocation4], 1
    %s2354 = scalar_lea.sflag [#allocation4], 1
    %2355 = vsyncpa %s2354, 1

</llo_original>
